<compile_context>
chip_gen: v5e
topology: v5e:2x2
jax: 0.10.0
libtpu: 0.0.40
codegen_flags: <defaults>
</compile_context>

<pallas_src>
from functools import partial

import jax
import jax.numpy as jnp
from jax import lax
from jax.experimental import pallas as pl
from jax.experimental.pallas import tpu as pltpu


# ---------------------------------------------------------------------------
# Kernel bodies
# ---------------------------------------------------------------------------
def _encoder_body(x_ref, w_ih_ref, w_hh_ref, b_ref, enc_in_ref, T):
    """Fused fwd+bwd bi-LSTM (layer 0) recurrence with lane-packed state.

    x_ref:      (T*B, 2D)  row t*B+b = [x[b, t, :] | x[b, T-1-t, :]]
    w_ih_ref:   (2D, 8H)   input->gate weights, gate columns packed as
                           [i_f i_b | f_f f_b | o_f o_b | g_f g_b]
    w_hh_ref:   (2H, 8H)   block-diagonal hidden->gate weights (same columns)
    b_ref:      (1, 8H)    pre-summed (b_ih + b_hh), same column order
    enc_in_ref: (T*B, 8H)  VMEM scratch for the hoisted input projections
    Returns the packed final hidden state [h_fwd | h_bwd]  (B, 2H)  == latent z.
    """
    TB = x_ref.shape[0]
    B = TB // T
    H2 = w_hh_ref.shape[0]           # 2H: packed (fwd|bwd) state width
    S = 3 * H2                       # 6H: contiguous sigmoid slab (i, f, o)

    # Hoisted, time-invariant input projections for all T steps and BOTH
    # directions in one slab matmul, biases folded in.
    enc_in_ref[...] = (
        jnp.dot(x_ref[...], w_ih_ref[...], preferred_element_type=jnp.float32)
        + b_ref[...])

    w_hh = w_hh_ref[...]             # loop-invariant -> MXU weight push hoisted

    h = jnp.zeros((B, H2), jnp.float32)   # [h_f | h_b]
    c = jnp.zeros((B, H2), jnp.float32)   # [c_f | c_b]
    for t in range(T):               # static -> fully unrolled
        gates = (enc_in_ref[t * B:(t + 1) * B, :]
                 + jnp.dot(h, w_hh, preferred_element_type=jnp.float32))
        sig = jax.nn.sigmoid(gates[:, :S])   # ONE EUP slab: i, f, o (both dirs)
        g = jnp.tanh(gates[:, S:])           # ONE EUP slab: g (both dirs)
        c = sig[:, H2:2 * H2] * c + sig[:, :H2] * g
        h = sig[:, 2 * H2:] * jnp.tanh(c)
    return h                          # == torch.cat([h_n[0], h_n[1]], dim=1)


def _autoencoder_kernel(
    x_ref,            # (T*Bb, 2D)  time-major, batch-minor flat input (fwd|rev)
    w_enc_ih_ref,     # (2D, 8H)
    w_enc_hh_ref,     # (2H, 8H)    block-diagonal
    b_enc_ref,        # (1, 8H)
    wd_ih_ref,        # (2H, 4H)    decoder input->gates, columns [i f o | g]
    wd_hh_ref,        # (H, 4H)     decoder hidden->gates, columns [i f o | g]
    bd_ref,           # (1, 4H)
    wl_ref,           # (H, D)      output Linear
    bl_ref,           # (1, D)
    y_ref,            # (T*Bb, D)   reconstruction (flat, same row order as x)
    z_ref,            # (Bb, 2H)    encoder latent
    enc_in_ref,       # scratch (T*Bb, 8H)
    h_dec_ref,        # scratch (T*Bb, H)
    *, seq_len,
):
    T = seq_len
    TB = x_ref.shape[0]
    B = TB // T
    H = wd_hh_ref.shape[0]

    # ---- encoder -------------------------------------------------------------
    z = _encoder_body(x_ref, w_enc_ih_ref, w_enc_hh_ref, b_enc_ref,
                      enc_in_ref, T)
    z_ref[...] = z

    # ---- decoder: latent identical every step -> input projection hoisted ----
    zin = (jnp.dot(z, wd_ih_ref[...], preferred_element_type=jnp.float32)
           + bd_ref[...])                          # (B, 4H), cols [i f o | g]
    wd_hh = wd_hh_ref[...]

    h = jnp.zeros((B, H), jnp.float32)
    c = jnp.zeros((B, H), jnp.float32)
    for t in range(T):
        gates = zin + jnp.dot(h, wd_hh, preferred_element_type=jnp.float32)
        sig = jax.nn.sigmoid(gates[:, :3 * H])     # ONE EUP slab: i, f, o
        g = jnp.tanh(gates[:, 3 * H:])
        c = sig[:, H:2 * H] * c + sig[:, :H] * g
        h = sig[:, 2 * H:] * jnp.tanh(c)
        h_dec_ref[t * B:(t + 1) * B, :] = h

    # ---- output Linear: one bulk matmul + single slab store -------------------
    # TODO(synk): once T*Bb >= 128, emit y transposed (D, T*Bb) for lane-dense
    # stores; at the 64x4 test size the masked store is negligible.
    y_ref[...] = (
        jnp.dot(h_dec_ref[...], wl_ref[...], preferred_element_type=jnp.float32)
        + bl_ref[...])


def _encoder_only_kernel(x_ref, w_enc_ih_ref, w_enc_hh_ref, b_enc_ref,
                         z_ref, enc_in_ref, *, seq_len):
    # just_encoder=True path: skips decoder recurrence, Linear and the y DMA.
    z_ref[...] = _encoder_body(x_ref, w_enc_ih_ref, w_enc_hh_ref, b_enc_ref,
                               enc_in_ref, seq_len)


# ---------------------------------------------------------------------------
# Parameter init (PyTorch-style shapes & U(-1/sqrt(H), 1/sqrt(H)))
# ---------------------------------------------------------------------------
def init_params(key, input_size, hidden_size):
    D, H = input_size, hidden_size
    k = 1.0 / float(hidden_size) ** 0.5
    keys = jax.random.split(key, 14)

    def u(kk, shape):
        return jax.random.uniform(kk, shape, jnp.float32, minval=-k, maxval=k)

    return {
        # encoder layer 0, forward direction
        "enc_f_w_ih": u(keys[0], (4 * H, D)),
        "enc_f_w_hh": u(keys[1], (4 * H, H)),
        "enc_f_b_ih": u(keys[2], (4 * H,)),
        "enc_f_b_hh": u(keys[3], (4 * H,)),
        # encoder layer 0, reverse direction
        "enc_b_w_ih": u(keys[4], (4 * H, D)),
        "enc_b_w_hh": u(keys[5], (4 * H, H)),
        "enc_b_b_ih": u(keys[6], (4 * H,)),
        "enc_b_b_hh": u(keys[7], (4 * H,)),
        # decoder LSTM (input size 2H, single layer)
        "dec_w_ih": u(keys[8], (4 * H, 2 * H)),
        "dec_w_hh": u(keys[9], (4 * H, H)),
        "dec_b_ih": u(keys[10], (4 * H,)),
        "dec_b_hh": u(keys[11], (4 * H,)),
        # final Linear(H -> D)
        "lin_w": u(keys[12], (D, H)),
        "lin_b": u(keys[13], (D,)),
    }


# ---------------------------------------------------------------------------
# Wrapper: weight packing, layout plumbing, pallas_call
# ---------------------------------------------------------------------------
def _gate_blocks_ifog(w, H):
    """Split PyTorch-ordered [i; f; g; o] blocks; return them in [i, f, o, g] order."""
    return w[0:H], w[H:2 * H], w[3 * H:4 * H], w[2 * H:3 * H]


def _pack_weights(p):
    H = p["enc_f_w_hh"].shape[1]
    D = p["enc_f_w_ih"].shape[1]

    # Encoder: packed gate columns [i_f i_b | f_f f_b | o_f o_b | g_f g_b].
    fw = _gate_blocks_ifog(p["enc_f_w_ih"], H)            # each (H, D)
    bw = _gate_blocks_ifog(p["enc_b_w_ih"], H)
    ZD = jnp.zeros((D, H), jnp.float32)
    w_enc_ih = jnp.concatenate([
        jnp.concatenate([m for f in fw for m in (f.T, ZD)], axis=1),  # fwd rows
        jnp.concatenate([m for b in bw for m in (ZD, b.T)], axis=1),  # bwd rows
    ], axis=0)                                            # (2D, 8H)

    fh = _gate_blocks_ifog(p["enc_f_w_hh"], H)            # each (H, H)
    bh = _gate_blocks_ifog(p["enc_b_w_hh"], H)
    ZH = jnp.zeros((H, H), jnp.float32)
    w_enc_hh = jnp.concatenate([
        jnp.concatenate([m for f in fh for m in (f.T, ZH)], axis=1),
        jnp.concatenate([m for b in bh for m in (ZH, b.T)], axis=1),
    ], axis=0)                                            # (2H, 8H) block-diag

    bfv = _gate_blocks_ifog(p["enc_f_b_ih"] + p["enc_f_b_hh"], H)
    bbv = _gate_blocks_ifog(p["enc_b_b_ih"] + p["enc_b_b_hh"], H)
    b_enc = jnp.concatenate(
        [v for pair in zip(bfv, bbv) for v in pair])[None, :]         # (1, 8H)

    # Decoder: gate columns reordered to [i f o | g].
    wd_ih = jnp.concatenate(
        [g.T for g in _gate_blocks_ifog(p["dec_w_ih"], H)], axis=1)   # (2H, 4H)
    wd_hh = jnp.concatenate(
        [g.T for g in _gate_blocks_ifog(p["dec_w_hh"], H)], axis=1)   # (H, 4H)
    bd = jnp.concatenate(
        list(_gate_blocks_ifog(p["dec_b_ih"] + p["dec_b_hh"], H)))[None, :]

    return (w_enc_ih, w_enc_hh, b_enc, wd_ih, wd_hh, bd,
            p["lin_w"].T, p["lin_b"][None, :])


def autoencoder_forward(x, p, just_encoder=False, return_latent=False,
                        batch_block=None):
    B, T, D = x.shape
    H = p["enc_f_w_hh"].shape[1]

    # Pad batch to a multiple of 8 (sublanes) so every per-step tile is a full
    # sublane block and all in-kernel row offsets are static & 8-aligned.
    if batch_block is None:
        Bp8 = max(8, ((B + 7) // 8) * 8)
        # Split the padded batch into >=2 chunks once it is large enough so the
        # "parallel" grid axis can shard across v7x's 2 TensorCores; the extra
        # ~0.35us/grid-step overhead is negligible on single-TC v5e/v6e.
        Bb = 8 * ((Bp8 // 2 + 7) // 8) if Bp8 >= 16 else Bp8
    else:
        assert batch_block % 8 == 0
        Bb = batch_block
    Bp = ((B + Bb - 1) // Bb) * Bb
    nb = Bp // Bb

    xf = x.astype(jnp.float32)
    if Bp != B:
        xf = jnp.concatenate([xf, jnp.zeros((Bp - B, T, D), jnp.float32)], 0)

    # Pack x and its time-reverse side by side so the hoisted encoder input
    # projection yields BOTH directions' gate columns for step t from ONE row:
    # row t*Bb + b = [x[b, t, :] | x[b, T-1-t, :]].  Pure layout plumbing done
    # by XLA outside the kernel; at D=4 both halves fit one 128-lane tile.
    x_cat = jnp.concatenate([xf, xf[:, ::-1, :]], axis=-1)       # (Bp, T, 2D)
    x_k = (x_cat.reshape(nb, Bb, T, 2 * D)
                .transpose(0, 2, 1, 3)
                .reshape(nb, T * Bb, 2 * D))

    (w_enc_ih, w_enc_hh, b_enc, wd_ih, wd_hh, bd, wl, bl) = _pack_weights(p)

    def rep(shape):   # replicated weight/bias: same (whole-array) block always
        return pl.BlockSpec(shape, lambda b, _n=len(shape): (0,) * _n)

    x_spec = pl.BlockSpec((None, T * Bb, 2 * D), lambda b: (b, 0, 0))
    z_spec = pl.BlockSpec((None, Bb, 2 * H), lambda b: (b, 0, 0))
    enc_specs = [x_spec, rep((2 * D, 8 * H)), rep((2 * H, 8 * H)),
                 rep((1, 8 * H))]
    enc_args = (x_k, w_enc_ih, w_enc_hh, b_enc)
    cparams = pltpu.CompilerParams(dimension_semantics=("parallel",))

    # VMEM note: enc_in scratch = T*Bb*8H*4 B, h_dec lane-pads H, and the x/y
    # blocks lane-pad D -> 128 (32x logical) and are double-buffered.  When
    # scaling Bb/H, keep the total under ~32 MiB for v7x (64 MiB physical).

    if just_encoder:
        z_k = pl.pallas_call(
            partial(_encoder_only_kernel, seq_len=T),
            grid=(nb,),
            out_shape=jax.ShapeDtypeStruct((nb, Bb, 2 * H), jnp.float32),
            in_specs=enc_specs,
            out_specs=z_spec,
            scratch_shapes=[pltpu.VMEM((T * Bb, 8 * H), jnp.float32)],
            compiler_params=cparams,
        )(*enc_args)
        return z_k.reshape(Bp, 2 * H)[:B]

    y_k, z_k = pl.pallas_call(
        partial(_autoencoder_kernel, seq_len=T),
        grid=(nb,),
        out_shape=(
            jax.ShapeDtypeStruct((nb, T * Bb, D), jnp.float32),
            jax.ShapeDtypeStruct((nb, Bb, 2 * H), jnp.float32),
        ),
        in_specs=enc_specs + [rep((2 * H, 4 * H)), rep((H, 4 * H)),
                              rep((1, 4 * H)), rep((H, D)), rep((1, D))],
        out_specs=(pl.BlockSpec((None, T * Bb, D), lambda b: (b, 0, 0)),
                   z_spec),
        scratch_shapes=[pltpu.VMEM((T * Bb, 8 * H), jnp.float32),
                        pltpu.VMEM((T * Bb, H), jnp.float32)],
        compiler_params=cparams,
    )(*enc_args, wd_ih, wd_hh, bd, wl, bl)

    # (nb, T*Bb, D) -> (nb,T,Bb,D) -> (nb,Bb,T,D) -> (Bp,T,D) -> drop padding
    y = (y_k.reshape(nb, T, Bb, D).transpose(0, 2, 1, 3)
             .reshape(Bp, T, D)[:B])
    if return_latent:
        return y, z_k.reshape(Bp, 2 * H)[:B]
    return y


# ---------------- pure-JAX reference (correctness check only) ---------------
def _lstm_ref(x_seq, w_ih, w_hh, b_ih, b_hh, H):
    B = x_seq.shape[1]

    def step(carry, x_t):
        h, c = carry
        gates = x_t @ w_ih.T + b_ih + h @ w_hh.T + b_hh
        i = jax.nn.sigmoid(gates[:, :H])
        f = jax.nn.sigmoid(gates[:, H:2 * H])
        g = jnp.tanh(gates[:, 2 * H:3 * H])
        o = jax.nn.sigmoid(gates[:, 3 * H:])
        c = f * c + i * g
        h = o * jnp.tanh(c)
        return (h, c), h

    (h, _), hs = lax.scan(step, (jnp.zeros((B, H)), jnp.zeros((B, H))), x_seq)
    return h, hs


def reference_forward(x, p, seq_len):
    H = p["enc_f_w_hh"].shape[1]
    x_tm = jnp.transpose(x, (1, 0, 2))
    h_f, _ = _lstm_ref(x_tm, p["enc_f_w_ih"], p["enc_f_w_hh"],
                       p["enc_f_b_ih"], p["enc_f_b_hh"], H)
    h_b, _ = _lstm_ref(x_tm[::-1], p["enc_b_w_ih"], p["enc_b_w_hh"],
                       p["enc_b_b_ih"], p["enc_b_b_hh"], H)
    z = jnp.concatenate([h_f, h_b], axis=1)
    z_seq = jnp.broadcast_to(z[None], (seq_len,) + z.shape)
    _, hs = _lstm_ref(z_seq, p["dec_w_ih"], p["dec_w_hh"],
                      p["dec_b_ih"], p["dec_b_hh"], H)
    y = hs @ p["lin_w"].T + p["lin_b"]
    return jnp.transpose(y, (1, 0, 2)), z


if __name__ == "__main__":
    input_size, hidden_size, num_layers, seq_len = 4, 32, 1, 8
    batch = 2

    key = jax.random.PRNGKey(0)
    k_x, k_p = jax.random.split(key)
    x = jax.random.normal(k_x, (batch, seq_len, input_size), jnp.float32)
    params = init_params(k_p, input_size, hidden_size)

    # Full autoencoder: ONE kernel call yields both y and the latent z.
    y, z = autoencoder_forward(x, params, return_latent=True)
    # Encoder-only path: runs a kernel that skips the decoder / Linear / y DMA.
    z_only = autoencoder_forward(x, params, just_encoder=True)
    jax.block_until_ready((y, z, z_only))

    y_exp, z_exp = reference_forward(x, params, seq_len)
    assert y.shape == (batch, seq_len, input_size)
    assert z.shape == (batch, 2 * hidden_size)
    assert z_only.shape == (batch, 2 * hidden_size)
    assert jnp.allclose(y, y_exp, rtol=1e-4, atol=1e-4)
    assert jnp.allclose(z, z_exp, rtol=1e-4, atol=1e-4)
    assert jnp.allclose(z_only, z_exp, rtol=1e-4, atol=1e-4)
    print("KERNEL_OK")
</pallas_src>

<mosaic_0001>
module attributes {stable_mosaic.version = 11 : i64} {
  func.func @_autoencoder_kernel(%arg0: i32, %arg1: memref<1x64x8xf32, #tpu.memory_space<vmem>>, %arg2: memref<8x256xf32, #tpu.memory_space<vmem>>, %arg3: memref<64x256xf32, #tpu.memory_space<vmem>>, %arg4: memref<1x256xf32, #tpu.memory_space<vmem>>, %arg5: memref<64x128xf32, #tpu.memory_space<vmem>>, %arg6: memref<32x128xf32, #tpu.memory_space<vmem>>, %arg7: memref<1x128xf32, #tpu.memory_space<vmem>>, %arg8: memref<32x4xf32, #tpu.memory_space<vmem>>, %arg9: memref<1x4xf32, #tpu.memory_space<vmem>>, %arg10: memref<1x64x4xf32, #tpu.memory_space<vmem>>, %arg11: memref<1x8x64xf32, #tpu.memory_space<vmem>>, %arg12: memref<64x256xf32, #tpu.memory_space<vmem>>, %arg13: memref<64x32xf32, #tpu.memory_space<vmem>>) attributes {dimension_semantics = [#tpu.dimension_semantics<parallel>], iteration_bounds = array<i64: 1>, scalar_prefetch = 0 : i64, scratch_operands = 2 : i64, tpu.core_type = #tpu.core_type<tc>, window_params = [{transform_indices = @transform_0, window_bounds = array<i64: 1, 64, 8>}, {pipeline_mode = #tpu.pipeline_mode<synchronous>, transform_indices = @transform_1, window_bounds = array<i64: 8, 256>}, {pipeline_mode = #tpu.pipeline_mode<synchronous>, transform_indices = @transform_2, window_bounds = array<i64: 64, 256>}, {pipeline_mode = #tpu.pipeline_mode<synchronous>, transform_indices = @transform_3, window_bounds = array<i64: 1, 256>}, {pipeline_mode = #tpu.pipeline_mode<synchronous>, transform_indices = @transform_4, window_bounds = array<i64: 64, 128>}, {pipeline_mode = #tpu.pipeline_mode<synchronous>, transform_indices = @transform_5, window_bounds = array<i64: 32, 128>}, {pipeline_mode = #tpu.pipeline_mode<synchronous>, transform_indices = @transform_6, window_bounds = array<i64: 1, 128>}, {pipeline_mode = #tpu.pipeline_mode<synchronous>, transform_indices = @transform_7, window_bounds = array<i64: 32, 4>}, {pipeline_mode = #tpu.pipeline_mode<synchronous>, transform_indices = @transform_8, window_bounds = array<i64: 1, 4>}, {transform_indices = @transform_9, window_bounds = array<i64: 1, 64, 4>}, {transform_indices = @transform_10, window_bounds = array<i64: 1, 8, 64>}]} {
    %c0 = arith.constant 0 : index
    %c0_0 = arith.constant 0 : index
    %c0_1 = arith.constant 0 : index
    %0 = vector.load %arg1[%c0, %c0_0, %c0_1] : memref<1x64x8xf32, #tpu.memory_space<vmem>>, vector<1x64x8xf32>
    %1 = vector.shape_cast %0 : vector<1x64x8xf32> to vector<64x8xf32>
    %c0_2 = arith.constant 0 : index
    %c0_3 = arith.constant 0 : index
    %2 = vector.load %arg2[%c0_2, %c0_3] : memref<8x256xf32, #tpu.memory_space<vmem>>, vector<8x256xf32>
    %cst = arith.constant dense<0.000000e+00> : vector<64x256xf32>
    %3 = tpu.matmul %1, %2, %cst {dimension_numbers = #tpu.dot_dimension_numbers<[1], [0], [0], [1], [0, 0, 1, 1], [], []>} : vector<64x8xf32>, vector<8x256xf32>, vector<64x256xf32> -> vector<64x256xf32>
    %c0_4 = arith.constant 0 : index
    %c0_5 = arith.constant 0 : index
    %4 = vector.load %arg4[%c0_4, %c0_5] : memref<1x256xf32, #tpu.memory_space<vmem>>, vector<1x256xf32>
    %5 = vector.broadcast %4 : vector<1x256xf32> to vector<64x256xf32>
    %6 = arith.addf %3, %5 : vector<64x256xf32>
    %c0_6 = arith.constant 0 : index
    %c0_7 = arith.constant 0 : index
    %7 = vector.load %arg12[%c0_6, %c0_7] : memref<64x256xf32, #tpu.memory_space<vmem>>, vector<64x256xf32>
    tpu.vector_store %arg12[%c0_6, %c0_7], %6 {strides = array<i32>} : memref<64x256xf32, #tpu.memory_space<vmem>>, vector<64x256xf32>,
    %c0_8 = arith.constant 0 : index
    %c0_9 = arith.constant 0 : index
    %8 = vector.load %arg3[%c0_8, %c0_9] : memref<64x256xf32, #tpu.memory_space<vmem>>, vector<64x256xf32>
    %cst_10 = arith.constant 0.000000e+00 : f32
    %9 = vector.broadcast %cst_10 : f32 to vector<8x64xf32>
    %cst_11 = arith.constant 0.000000e+00 : f32
    %10 = vector.broadcast %cst_11 : f32 to vector<8x64xf32>
    %c0_12 = arith.constant 0 : index
    %c0_13 = arith.constant 0 : index
    %11 = vector.load %arg12[%c0_12, %c0_13] : memref<64x256xf32, #tpu.memory_space<vmem>>, vector<8x256xf32>
    %cst_14 = arith.constant dense<0.000000e+00> : vector<8x256xf32>
    %12 = tpu.matmul %9, %8, %cst_14 {dimension_numbers = #tpu.dot_dimension_numbers<[1], [0], [0], [1], [0, 0, 1, 1], [], []>} : vector<8x64xf32>, vector<64x256xf32>, vector<8x256xf32> -> vector<8x256xf32>
    %13 = arith.addf %11, %12 : vector<8x256xf32>
    %14 = vector.extract_strided_slice %13 {offsets = [0, 0], sizes = [8, 192], strides = [1, 1]} : vector<8x256xf32> to vector<8x192xf32>
    %15 = arith.negf %14 : vector<8x192xf32>
    %16 = math.exp %15 : vector<8x192xf32>
    %cst_15 = arith.constant 1.000000e+00 : f32
    %17 = vector.broadcast %cst_15 : f32 to vector<8x192xf32>
    %18 = arith.addf %17, %16 : vector<8x192xf32>
    %19 = arith.divf %17, %18 : vector<8x192xf32>
    %20 = vector.extract_strided_slice %13 {offsets = [0, 192], sizes = [8, 64], strides = [1, 1]} : vector<8x256xf32> to vector<8x64xf32>
    %21 = math.tanh %20 : vector<8x64xf32>
    %22 = vector.extract_strided_slice %19 {offsets = [0, 64], sizes = [8, 64], strides = [1, 1]} : vector<8x192xf32> to vector<8x64xf32>
    %23 = arith.mulf %22, %10 : vector<8x64xf32>
    %24 = vector.extract_strided_slice %19 {offsets = [0, 0], sizes = [8, 64], strides = [1, 1]} : vector<8x192xf32> to vector<8x64xf32>
    %25 = arith.mulf %24, %21 : vector<8x64xf32>
    %26 = arith.addf %23, %25 : vector<8x64xf32>
    %27 = vector.extract_strided_slice %19 {offsets = [0, 128], sizes = [8, 64], strides = [1, 1]} : vector<8x192xf32> to vector<8x64xf32>
    %28 = math.tanh %26 : vector<8x64xf32>
    %29 = arith.mulf %27, %28 : vector<8x64xf32>
    %c8 = arith.constant 8 : index
    %c0_16 = arith.constant 0 : index
    %30 = vector.load %arg12[%c8, %c0_16] : memref<64x256xf32, #tpu.memory_space<vmem>>, vector<8x256xf32>
    %cst_17 = arith.constant dense<0.000000e+00> : vector<8x256xf32>
    %31 = tpu.matmul %29, %8, %cst_17 {dimension_numbers = #tpu.dot_dimension_numbers<[1], [0], [0], [1], [0, 0, 1, 1], [], []>} : vector<8x64xf32>, vector<64x256xf32>, vector<8x256xf32> -> vector<8x256xf32>
    %32 = arith.addf %30, %31 : vector<8x256xf32>
    %33 = vector.extract_strided_slice %32 {offsets = [0, 0], sizes = [8, 192], strides = [1, 1]} : vector<8x256xf32> to vector<8x192xf32>
    %34 = arith.negf %33 : vector<8x192xf32>
    %35 = math.exp %34 : vector<8x192xf32>
    %cst_18 = arith.constant 1.000000e+00 : f32
    %36 = vector.broadcast %cst_18 : f32 to vector<8x192xf32>
    %37 = arith.addf %36, %35 : vector<8x192xf32>
    %38 = arith.divf %36, %37 : vector<8x192xf32>
    %39 = vector.extract_strided_slice %32 {offsets = [0, 192], sizes = [8, 64], strides = [1, 1]} : vector<8x256xf32> to vector<8x64xf32>
    %40 = math.tanh %39 : vector<8x64xf32>
    %41 = vector.extract_strided_slice %38 {offsets = [0, 64], sizes = [8, 64], strides = [1, 1]} : vector<8x192xf32> to vector<8x64xf32>
    %42 = arith.mulf %41, %26 : vector<8x64xf32>
    %43 = vector.extract_strided_slice %38 {offsets = [0, 0], sizes = [8, 64], strides = [1, 1]} : vector<8x192xf32> to vector<8x64xf32>
    %44 = arith.mulf %43, %40 : vector<8x64xf32>
    %45 = arith.addf %42, %44 : vector<8x64xf32>
    %46 = vector.extract_strided_slice %38 {offsets = [0, 128], sizes = [8, 64], strides = [1, 1]} : vector<8x192xf32> to vector<8x64xf32>
    %47 = math.tanh %45 : vector<8x64xf32>
    %48 = arith.mulf %46, %47 : vector<8x64xf32>
    %c16 = arith.constant 16 : index
    %c0_19 = arith.constant 0 : index
    %49 = vector.load %arg12[%c16, %c0_19] : memref<64x256xf32, #tpu.memory_space<vmem>>, vector<8x256xf32>
    %cst_20 = arith.constant dense<0.000000e+00> : vector<8x256xf32>
    %50 = tpu.matmul %48, %8, %cst_20 {dimension_numbers = #tpu.dot_dimension_numbers<[1], [0], [0], [1], [0, 0, 1, 1], [], []>} : vector<8x64xf32>, vector<64x256xf32>, vector<8x256xf32> -> vector<8x256xf32>
    %51 = arith.addf %49, %50 : vector<8x256xf32>
    %52 = vector.extract_strided_slice %51 {offsets = [0, 0], sizes = [8, 192], strides = [1, 1]} : vector<8x256xf32> to vector<8x192xf32>
    %53 = arith.negf %52 : vector<8x192xf32>
    %54 = math.exp %53 : vector<8x192xf32>
    %cst_21 = arith.constant 1.000000e+00 : f32
    %55 = vector.broadcast %cst_21 : f32 to vector<8x192xf32>
    %56 = arith.addf %55, %54 : vector<8x192xf32>
    %57 = arith.divf %55, %56 : vector<8x192xf32>
    %58 = vector.extract_strided_slice %51 {offsets = [0, 192], sizes = [8, 64], strides = [1, 1]} : vector<8x256xf32> to vector<8x64xf32>
    %59 = math.tanh %58 : vector<8x64xf32>
    %60 = vector.extract_strided_slice %57 {offsets = [0, 64], sizes = [8, 64], strides = [1, 1]} : vector<8x192xf32> to vector<8x64xf32>
    %61 = arith.mulf %60, %45 : vector<8x64xf32>
    %62 = vector.extract_strided_slice %57 {offsets = [0, 0], sizes = [8, 64], strides = [1, 1]} : vector<8x192xf32> to vector<8x64xf32>
    %63 = arith.mulf %62, %59 : vector<8x64xf32>
    %64 = arith.addf %61, %63 : vector<8x64xf32>
    %65 = vector.extract_strided_slice %57 {offsets = [0, 128], sizes = [8, 64], strides = [1, 1]} : vector<8x192xf32> to vector<8x64xf32>
    %66 = math.tanh %64 : vector<8x64xf32>
    %67 = arith.mulf %65, %66 : vector<8x64xf32>
    %c24 = arith.constant 24 : index
    %c0_22 = arith.constant 0 : index
    %68 = vector.load %arg12[%c24, %c0_22] : memref<64x256xf32, #tpu.memory_space<vmem>>, vector<8x256xf32>
    %cst_23 = arith.constant dense<0.000000e+00> : vector<8x256xf32>
    %69 = tpu.matmul %67, %8, %cst_23 {dimension_numbers = #tpu.dot_dimension_numbers<[1], [0], [0], [1], [0, 0, 1, 1], [], []>} : vector<8x64xf32>, vector<64x256xf32>, vector<8x256xf32> -> vector<8x256xf32>
    %70 = arith.addf %68, %69 : vector<8x256xf32>
    %71 = vector.extract_strided_slice %70 {offsets = [0, 0], sizes = [8, 192], strides = [1, 1]} : vector<8x256xf32> to vector<8x192xf32>
    %72 = arith.negf %71 : vector<8x192xf32>
    %73 = math.exp %72 : vector<8x192xf32>
    %cst_24 = arith.constant 1.000000e+00 : f32
    %74 = vector.broadcast %cst_24 : f32 to vector<8x192xf32>
    %75 = arith.addf %74, %73 : vector<8x192xf32>
    %76 = arith.divf %74, %75 : vector<8x192xf32>
    %77 = vector.extract_strided_slice %70 {offsets = [0, 192], sizes = [8, 64], strides = [1, 1]} : vector<8x256xf32> to vector<8x64xf32>
    %78 = math.tanh %77 : vector<8x64xf32>
    %79 = vector.extract_strided_slice %76 {offsets = [0, 64], sizes = [8, 64], strides = [1, 1]} : vector<8x192xf32> to vector<8x64xf32>
    %80 = arith.mulf %79, %64 : vector<8x64xf32>
    %81 = vector.extract_strided_slice %76 {offsets = [0, 0], sizes = [8, 64], strides = [1, 1]} : vector<8x192xf32> to vector<8x64xf32>
    %82 = arith.mulf %81, %78 : vector<8x64xf32>
    %83 = arith.addf %80, %82 : vector<8x64xf32>
    %84 = vector.extract_strided_slice %76 {offsets = [0, 128], sizes = [8, 64], strides = [1, 1]} : vector<8x192xf32> to vector<8x64xf32>
    %85 = math.tanh %83 : vector<8x64xf32>
    %86 = arith.mulf %84, %85 : vector<8x64xf32>
    %c32 = arith.constant 32 : index
    %c0_25 = arith.constant 0 : index
    %87 = vector.load %arg12[%c32, %c0_25] : memref<64x256xf32, #tpu.memory_space<vmem>>, vector<8x256xf32>
    %cst_26 = arith.constant dense<0.000000e+00> : vector<8x256xf32>
    %88 = tpu.matmul %86, %8, %cst_26 {dimension_numbers = #tpu.dot_dimension_numbers<[1], [0], [0], [1], [0, 0, 1, 1], [], []>} : vector<8x64xf32>, vector<64x256xf32>, vector<8x256xf32> -> vector<8x256xf32>
    %89 = arith.addf %87, %88 : vector<8x256xf32>
    %90 = vector.extract_strided_slice %89 {offsets = [0, 0], sizes = [8, 192], strides = [1, 1]} : vector<8x256xf32> to vector<8x192xf32>
    %91 = arith.negf %90 : vector<8x192xf32>
    %92 = math.exp %91 : vector<8x192xf32>
    %cst_27 = arith.constant 1.000000e+00 : f32
    %93 = vector.broadcast %cst_27 : f32 to vector<8x192xf32>
    %94 = arith.addf %93, %92 : vector<8x192xf32>
    %95 = arith.divf %93, %94 : vector<8x192xf32>
    %96 = vector.extract_strided_slice %89 {offsets = [0, 192], sizes = [8, 64], strides = [1, 1]} : vector<8x256xf32> to vector<8x64xf32>
    %97 = math.tanh %96 : vector<8x64xf32>
    %98 = vector.extract_strided_slice %95 {offsets = [0, 64], sizes = [8, 64], strides = [1, 1]} : vector<8x192xf32> to vector<8x64xf32>
    %99 = arith.mulf %98, %83 : vector<8x64xf32>
    %100 = vector.extract_strided_slice %95 {offsets = [0, 0], sizes = [8, 64], strides = [1, 1]} : vector<8x192xf32> to vector<8x64xf32>
    %101 = arith.mulf %100, %97 : vector<8x64xf32>
    %102 = arith.addf %99, %101 : vector<8x64xf32>
    %103 = vector.extract_strided_slice %95 {offsets = [0, 128], sizes = [8, 64], strides = [1, 1]} : vector<8x192xf32> to vector<8x64xf32>
    %104 = math.tanh %102 : vector<8x64xf32>
    %105 = arith.mulf %103, %104 : vector<8x64xf32>
    %c40 = arith.constant 40 : index
    %c0_28 = arith.constant 0 : index
    %106 = vector.load %arg12[%c40, %c0_28] : memref<64x256xf32, #tpu.memory_space<vmem>>, vector<8x256xf32>
    %cst_29 = arith.constant dense<0.000000e+00> : vector<8x256xf32>
    %107 = tpu.matmul %105, %8, %cst_29 {dimension_numbers = #tpu.dot_dimension_numbers<[1], [0], [0], [1], [0, 0, 1, 1], [], []>} : vector<8x64xf32>, vector<64x256xf32>, vector<8x256xf32> -> vector<8x256xf32>
    %108 = arith.addf %106, %107 : vector<8x256xf32>
    %109 = vector.extract_strided_slice %108 {offsets = [0, 0], sizes = [8, 192], strides = [1, 1]} : vector<8x256xf32> to vector<8x192xf32>
    %110 = arith.negf %109 : vector<8x192xf32>
    %111 = math.exp %110 : vector<8x192xf32>
    %cst_30 = arith.constant 1.000000e+00 : f32
    %112 = vector.broadcast %cst_30 : f32 to vector<8x192xf32>
    %113 = arith.addf %112, %111 : vector<8x192xf32>
    %114 = arith.divf %112, %113 : vector<8x192xf32>
    %115 = vector.extract_strided_slice %108 {offsets = [0, 192], sizes = [8, 64], strides = [1, 1]} : vector<8x256xf32> to vector<8x64xf32>
    %116 = math.tanh %115 : vector<8x64xf32>
    %117 = vector.extract_strided_slice %114 {offsets = [0, 64], sizes = [8, 64], strides = [1, 1]} : vector<8x192xf32> to vector<8x64xf32>
    %118 = arith.mulf %117, %102 : vector<8x64xf32>
    %119 = vector.extract_strided_slice %114 {offsets = [0, 0], sizes = [8, 64], strides = [1, 1]} : vector<8x192xf32> to vector<8x64xf32>
    %120 = arith.mulf %119, %116 : vector<8x64xf32>
    %121 = arith.addf %118, %120 : vector<8x64xf32>
    %122 = vector.extract_strided_slice %114 {offsets = [0, 128], sizes = [8, 64], strides = [1, 1]} : vector<8x192xf32> to vector<8x64xf32>
    %123 = math.tanh %121 : vector<8x64xf32>
    %124 = arith.mulf %122, %123 : vector<8x64xf32>
    %c48 = arith.constant 48 : index
    %c0_31 = arith.constant 0 : index
    %125 = vector.load %arg12[%c48, %c0_31] : memref<64x256xf32, #tpu.memory_space<vmem>>, vector<8x256xf32>
    %cst_32 = arith.constant dense<0.000000e+00> : vector<8x256xf32>
    %126 = tpu.matmul %124, %8, %cst_32 {dimension_numbers = #tpu.dot_dimension_numbers<[1], [0], [0], [1], [0, 0, 1, 1], [], []>} : vector<8x64xf32>, vector<64x256xf32>, vector<8x256xf32> -> vector<8x256xf32>
    %127 = arith.addf %125, %126 : vector<8x256xf32>
    %128 = vector.extract_strided_slice %127 {offsets = [0, 0], sizes = [8, 192], strides = [1, 1]} : vector<8x256xf32> to vector<8x192xf32>
    %129 = arith.negf %128 : vector<8x192xf32>
    %130 = math.exp %129 : vector<8x192xf32>
    %cst_33 = arith.constant 1.000000e+00 : f32
    %131 = vector.broadcast %cst_33 : f32 to vector<8x192xf32>
    %132 = arith.addf %131, %130 : vector<8x192xf32>
    %133 = arith.divf %131, %132 : vector<8x192xf32>
    %134 = vector.extract_strided_slice %127 {offsets = [0, 192], sizes = [8, 64], strides = [1, 1]} : vector<8x256xf32> to vector<8x64xf32>
    %135 = math.tanh %134 : vector<8x64xf32>
    %136 = vector.extract_strided_slice %133 {offsets = [0, 64], sizes = [8, 64], strides = [1, 1]} : vector<8x192xf32> to vector<8x64xf32>
    %137 = arith.mulf %136, %121 : vector<8x64xf32>
    %138 = vector.extract_strided_slice %133 {offsets = [0, 0], sizes = [8, 64], strides = [1, 1]} : vector<8x192xf32> to vector<8x64xf32>
    %139 = arith.mulf %138, %135 : vector<8x64xf32>
    %140 = arith.addf %137, %139 : vector<8x64xf32>
    %141 = vector.extract_strided_slice %133 {offsets = [0, 128], sizes = [8, 64], strides = [1, 1]} : vector<8x192xf32> to vector<8x64xf32>
    %142 = math.tanh %140 : vector<8x64xf32>
    %143 = arith.mulf %141, %142 : vector<8x64xf32>
    %c56 = arith.constant 56 : index
    %c0_34 = arith.constant 0 : index
    %144 = vector.load %arg12[%c56, %c0_34] : memref<64x256xf32, #tpu.memory_space<vmem>>, vector<8x256xf32>
    %cst_35 = arith.constant dense<0.000000e+00> : vector<8x256xf32>
    %145 = tpu.matmul %143, %8, %cst_35 {dimension_numbers = #tpu.dot_dimension_numbers<[1], [0], [0], [1], [0, 0, 1, 1], [], []>} : vector<8x64xf32>, vector<64x256xf32>, vector<8x256xf32> -> vector<8x256xf32>
    %146 = arith.addf %144, %145 : vector<8x256xf32>
    %147 = vector.extract_strided_slice %146 {offsets = [0, 0], sizes = [8, 192], strides = [1, 1]} : vector<8x256xf32> to vector<8x192xf32>
    %148 = arith.negf %147 : vector<8x192xf32>
    %149 = math.exp %148 : vector<8x192xf32>
    %cst_36 = arith.constant 1.000000e+00 : f32
    %150 = vector.broadcast %cst_36 : f32 to vector<8x192xf32>
    %151 = arith.addf %150, %149 : vector<8x192xf32>
    %152 = arith.divf %150, %151 : vector<8x192xf32>
    %153 = vector.extract_strided_slice %146 {offsets = [0, 192], sizes = [8, 64], strides = [1, 1]} : vector<8x256xf32> to vector<8x64xf32>
    %154 = math.tanh %153 : vector<8x64xf32>
    %155 = vector.extract_strided_slice %152 {offsets = [0, 64], sizes = [8, 64], strides = [1, 1]} : vector<8x192xf32> to vector<8x64xf32>
    %156 = arith.mulf %155, %140 : vector<8x64xf32>
    %157 = vector.extract_strided_slice %152 {offsets = [0, 0], sizes = [8, 64], strides = [1, 1]} : vector<8x192xf32> to vector<8x64xf32>
    %158 = arith.mulf %157, %154 : vector<8x64xf32>
    %159 = arith.addf %156, %158 : vector<8x64xf32>
    %160 = vector.extract_strided_slice %152 {offsets = [0, 128], sizes = [8, 64], strides = [1, 1]} : vector<8x192xf32> to vector<8x64xf32>
    %161 = math.tanh %159 : vector<8x64xf32>
    %162 = arith.mulf %160, %161 : vector<8x64xf32>
    %c0_37 = arith.constant 0 : index
    %c0_38 = arith.constant 0 : index
    %c0_39 = arith.constant 0 : index
    %163 = vector.load %arg11[%c0_37, %c0_38, %c0_39] : memref<1x8x64xf32, #tpu.memory_space<vmem>>, vector<1x8x64xf32>
    %164 = vector.shape_cast %163 : vector<1x8x64xf32> to vector<8x64xf32>
    %165 = vector.shape_cast %162 : vector<8x64xf32> to vector<1x8x64xf32>
    tpu.vector_store %arg11[%c0_37, %c0_38, %c0_39], %165 {strides = array<i32>} : memref<1x8x64xf32, #tpu.memory_space<vmem>>, vector<1x8x64xf32>,
    %c0_40 = arith.constant 0 : index
    %c0_41 = arith.constant 0 : index
    %166 = vector.load %arg5[%c0_40, %c0_41] : memref<64x128xf32, #tpu.memory_space<vmem>>, vector<64x128xf32>
    %cst_42 = arith.constant dense<0.000000e+00> : vector<8x128xf32>
    %167 = tpu.matmul %162, %166, %cst_42 {dimension_numbers = #tpu.dot_dimension_numbers<[1], [0], [0], [1], [0, 0, 1, 1], [], []>} : vector<8x64xf32>, vector<64x128xf32>, vector<8x128xf32> -> vector<8x128xf32>
    %c0_43 = arith.constant 0 : index
    %c0_44 = arith.constant 0 : index
    %168 = vector.load %arg7[%c0_43, %c0_44] : memref<1x128xf32, #tpu.memory_space<vmem>>, vector<1x128xf32>
    %169 = vector.broadcast %168 : vector<1x128xf32> to vector<8x128xf32>
    %170 = arith.addf %167, %169 : vector<8x128xf32>
    %c0_45 = arith.constant 0 : index
    %c0_46 = arith.constant 0 : index
    %171 = vector.load %arg6[%c0_45, %c0_46] : memref<32x128xf32, #tpu.memory_space<vmem>>, vector<32x128xf32>
    %cst_47 = arith.constant 0.000000e+00 : f32
    %172 = vector.broadcast %cst_47 : f32 to vector<8x32xf32>
    %cst_48 = arith.constant 0.000000e+00 : f32
    %173 = vector.broadcast %cst_48 : f32 to vector<8x32xf32>
    %cst_49 = arith.constant dense<0.000000e+00> : vector<8x128xf32>
    %174 = tpu.matmul %172, %171, %cst_49 {dimension_numbers = #tpu.dot_dimension_numbers<[1], [0], [0], [1], [0, 0, 1, 1], [], []>} : vector<8x32xf32>, vector<32x128xf32>, vector<8x128xf32> -> vector<8x128xf32>
    %175 = arith.addf %170, %174 : vector<8x128xf32>
    %176 = vector.extract_strided_slice %175 {offsets = [0, 0], sizes = [8, 96], strides = [1, 1]} : vector<8x128xf32> to vector<8x96xf32>
    %177 = arith.negf %176 : vector<8x96xf32>
    %178 = math.exp %177 : vector<8x96xf32>
    %cst_50 = arith.constant 1.000000e+00 : f32
    %179 = vector.broadcast %cst_50 : f32 to vector<8x96xf32>
    %180 = arith.addf %179, %178 : vector<8x96xf32>
    %181 = arith.divf %179, %180 : vector<8x96xf32>
    %182 = vector.extract_strided_slice %175 {offsets = [0, 96], sizes = [8, 32], strides = [1, 1]} : vector<8x128xf32> to vector<8x32xf32>
    %183 = math.tanh %182 : vector<8x32xf32>
    %184 = vector.extract_strided_slice %181 {offsets = [0, 32], sizes = [8, 32], strides = [1, 1]} : vector<8x96xf32> to vector<8x32xf32>
    %185 = arith.mulf %184, %173 : vector<8x32xf32>
    %186 = vector.extract_strided_slice %181 {offsets = [0, 0], sizes = [8, 32], strides = [1, 1]} : vector<8x96xf32> to vector<8x32xf32>
    %187 = arith.mulf %186, %183 : vector<8x32xf32>
    %188 = arith.addf %185, %187 : vector<8x32xf32>
    %189 = vector.extract_strided_slice %181 {offsets = [0, 64], sizes = [8, 32], strides = [1, 1]} : vector<8x96xf32> to vector<8x32xf32>
    %190 = math.tanh %188 : vector<8x32xf32>
    %191 = arith.mulf %189, %190 : vector<8x32xf32>
    %c0_51 = arith.constant 0 : index
    %c0_52 = arith.constant 0 : index
    %192 = vector.load %arg13[%c0_51, %c0_52] : memref<64x32xf32, #tpu.memory_space<vmem>>, vector<8x32xf32>
    tpu.vector_store %arg13[%c0_51, %c0_52], %191 {strides = array<i32>} : memref<64x32xf32, #tpu.memory_space<vmem>>, vector<8x32xf32>,
    %cst_53 = arith.constant dense<0.000000e+00> : vector<8x128xf32>
    %193 = tpu.matmul %191, %171, %cst_53 {dimension_numbers = #tpu.dot_dimension_numbers<[1], [0], [0], [1], [0, 0, 1, 1], [], []>} : vector<8x32xf32>, vector<32x128xf32>, vector<8x128xf32> -> vector<8x128xf32>
    %194 = arith.addf %170, %193 : vector<8x128xf32>
    %195 = vector.extract_strided_slice %194 {offsets = [0, 0], sizes = [8, 96], strides = [1, 1]} : vector<8x128xf32> to vector<8x96xf32>
    %196 = arith.negf %195 : vector<8x96xf32>
    %197 = math.exp %196 : vector<8x96xf32>
    %cst_54 = arith.constant 1.000000e+00 : f32
    %198 = vector.broadcast %cst_54 : f32 to vector<8x96xf32>
    %199 = arith.addf %198, %197 : vector<8x96xf32>
    %200 = arith.divf %198, %199 : vector<8x96xf32>
    %201 = vector.extract_strided_slice %194 {offsets = [0, 96], sizes = [8, 32], strides = [1, 1]} : vector<8x128xf32> to vector<8x32xf32>
    %202 = math.tanh %201 : vector<8x32xf32>
    %203 = vector.extract_strided_slice %200 {offsets = [0, 32], sizes = [8, 32], strides = [1, 1]} : vector<8x96xf32> to vector<8x32xf32>
    %204 = arith.mulf %203, %188 : vector<8x32xf32>
    %205 = vector.extract_strided_slice %200 {offsets = [0, 0], sizes = [8, 32], strides = [1, 1]} : vector<8x96xf32> to vector<8x32xf32>
    %206 = arith.mulf %205, %202 : vector<8x32xf32>
    %207 = arith.addf %204, %206 : vector<8x32xf32>
    %208 = vector.extract_strided_slice %200 {offsets = [0, 64], sizes = [8, 32], strides = [1, 1]} : vector<8x96xf32> to vector<8x32xf32>
    %209 = math.tanh %207 : vector<8x32xf32>
    %210 = arith.mulf %208, %209 : vector<8x32xf32>
    %c8_55 = arith.constant 8 : index
    %c0_56 = arith.constant 0 : index
    %211 = vector.load %arg13[%c8_55, %c0_56] : memref<64x32xf32, #tpu.memory_space<vmem>>, vector<8x32xf32>
    tpu.vector_store %arg13[%c8_55, %c0_56], %210 {strides = array<i32>} : memref<64x32xf32, #tpu.memory_space<vmem>>, vector<8x32xf32>,
    %cst_57 = arith.constant dense<0.000000e+00> : vector<8x128xf32>
    %212 = tpu.matmul %210, %171, %cst_57 {dimension_numbers = #tpu.dot_dimension_numbers<[1], [0], [0], [1], [0, 0, 1, 1], [], []>} : vector<8x32xf32>, vector<32x128xf32>, vector<8x128xf32> -> vector<8x128xf32>
    %213 = arith.addf %170, %212 : vector<8x128xf32>
    %214 = vector.extract_strided_slice %213 {offsets = [0, 0], sizes = [8, 96], strides = [1, 1]} : vector<8x128xf32> to vector<8x96xf32>
    %215 = arith.negf %214 : vector<8x96xf32>
    %216 = math.exp %215 : vector<8x96xf32>
    %cst_58 = arith.constant 1.000000e+00 : f32
    %217 = vector.broadcast %cst_58 : f32 to vector<8x96xf32>
    %218 = arith.addf %217, %216 : vector<8x96xf32>
    %219 = arith.divf %217, %218 : vector<8x96xf32>
    %220 = vector.extract_strided_slice %213 {offsets = [0, 96], sizes = [8, 32], strides = [1, 1]} : vector<8x128xf32> to vector<8x32xf32>
    %221 = math.tanh %220 : vector<8x32xf32>
    %222 = vector.extract_strided_slice %219 {offsets = [0, 32], sizes = [8, 32], strides = [1, 1]} : vector<8x96xf32> to vector<8x32xf32>
    %223 = arith.mulf %222, %207 : vector<8x32xf32>
    %224 = vector.extract_strided_slice %219 {offsets = [0, 0], sizes = [8, 32], strides = [1, 1]} : vector<8x96xf32> to vector<8x32xf32>
    %225 = arith.mulf %224, %221 : vector<8x32xf32>
    %226 = arith.addf %223, %225 : vector<8x32xf32>
    %227 = vector.extract_strided_slice %219 {offsets = [0, 64], sizes = [8, 32], strides = [1, 1]} : vector<8x96xf32> to vector<8x32xf32>
    %228 = math.tanh %226 : vector<8x32xf32>
    %229 = arith.mulf %227, %228 : vector<8x32xf32>
    %c16_59 = arith.constant 16 : index
    %c0_60 = arith.constant 0 : index
    %230 = vector.load %arg13[%c16_59, %c0_60] : memref<64x32xf32, #tpu.memory_space<vmem>>, vector<8x32xf32>
    tpu.vector_store %arg13[%c16_59, %c0_60], %229 {strides = array<i32>} : memref<64x32xf32, #tpu.memory_space<vmem>>, vector<8x32xf32>,
    %cst_61 = arith.constant dense<0.000000e+00> : vector<8x128xf32>
    %231 = tpu.matmul %229, %171, %cst_61 {dimension_numbers = #tpu.dot_dimension_numbers<[1], [0], [0], [1], [0, 0, 1, 1], [], []>} : vector<8x32xf32>, vector<32x128xf32>, vector<8x128xf32> -> vector<8x128xf32>
    %232 = arith.addf %170, %231 : vector<8x128xf32>
    %233 = vector.extract_strided_slice %232 {offsets = [0, 0], sizes = [8, 96], strides = [1, 1]} : vector<8x128xf32> to vector<8x96xf32>
    %234 = arith.negf %233 : vector<8x96xf32>
    %235 = math.exp %234 : vector<8x96xf32>
    %cst_62 = arith.constant 1.000000e+00 : f32
    %236 = vector.broadcast %cst_62 : f32 to vector<8x96xf32>
    %237 = arith.addf %236, %235 : vector<8x96xf32>
    %238 = arith.divf %236, %237 : vector<8x96xf32>
    %239 = vector.extract_strided_slice %232 {offsets = [0, 96], sizes = [8, 32], strides = [1, 1]} : vector<8x128xf32> to vector<8x32xf32>
    %240 = math.tanh %239 : vector<8x32xf32>
    %241 = vector.extract_strided_slice %238 {offsets = [0, 32], sizes = [8, 32], strides = [1, 1]} : vector<8x96xf32> to vector<8x32xf32>
    %242 = arith.mulf %241, %226 : vector<8x32xf32>
    %243 = vector.extract_strided_slice %238 {offsets = [0, 0], sizes = [8, 32], strides = [1, 1]} : vector<8x96xf32> to vector<8x32xf32>
    %244 = arith.mulf %243, %240 : vector<8x32xf32>
    %245 = arith.addf %242, %244 : vector<8x32xf32>
    %246 = vector.extract_strided_slice %238 {offsets = [0, 64], sizes = [8, 32], strides = [1, 1]} : vector<8x96xf32> to vector<8x32xf32>
    %247 = math.tanh %245 : vector<8x32xf32>
    %248 = arith.mulf %246, %247 : vector<8x32xf32>
    %c24_63 = arith.constant 24 : index
    %c0_64 = arith.constant 0 : index
    %249 = vector.load %arg13[%c24_63, %c0_64] : memref<64x32xf32, #tpu.memory_space<vmem>>, vector<8x32xf32>
    tpu.vector_store %arg13[%c24_63, %c0_64], %248 {strides = array<i32>} : memref<64x32xf32, #tpu.memory_space<vmem>>, vector<8x32xf32>,
    %cst_65 = arith.constant dense<0.000000e+00> : vector<8x128xf32>
    %250 = tpu.matmul %248, %171, %cst_65 {dimension_numbers = #tpu.dot_dimension_numbers<[1], [0], [0], [1], [0, 0, 1, 1], [], []>} : vector<8x32xf32>, vector<32x128xf32>, vector<8x128xf32> -> vector<8x128xf32>
    %251 = arith.addf %170, %250 : vector<8x128xf32>
    %252 = vector.extract_strided_slice %251 {offsets = [0, 0], sizes = [8, 96], strides = [1, 1]} : vector<8x128xf32> to vector<8x96xf32>
    %253 = arith.negf %252 : vector<8x96xf32>
    %254 = math.exp %253 : vector<8x96xf32>
    %cst_66 = arith.constant 1.000000e+00 : f32
    %255 = vector.broadcast %cst_66 : f32 to vector<8x96xf32>
    %256 = arith.addf %255, %254 : vector<8x96xf32>
    %257 = arith.divf %255, %256 : vector<8x96xf32>
    %258 = vector.extract_strided_slice %251 {offsets = [0, 96], sizes = [8, 32], strides = [1, 1]} : vector<8x128xf32> to vector<8x32xf32>
    %259 = math.tanh %258 : vector<8x32xf32>
    %260 = vector.extract_strided_slice %257 {offsets = [0, 32], sizes = [8, 32], strides = [1, 1]} : vector<8x96xf32> to vector<8x32xf32>
    %261 = arith.mulf %260, %245 : vector<8x32xf32>
    %262 = vector.extract_strided_slice %257 {offsets = [0, 0], sizes = [8, 32], strides = [1, 1]} : vector<8x96xf32> to vector<8x32xf32>
    %263 = arith.mulf %262, %259 : vector<8x32xf32>
    %264 = arith.addf %261, %263 : vector<8x32xf32>
    %265 = vector.extract_strided_slice %257 {offsets = [0, 64], sizes = [8, 32], strides = [1, 1]} : vector<8x96xf32> to vector<8x32xf32>
    %266 = math.tanh %264 : vector<8x32xf32>
    %267 = arith.mulf %265, %266 : vector<8x32xf32>
    %c32_67 = arith.constant 32 : index
    %c0_68 = arith.constant 0 : index
    %268 = vector.load %arg13[%c32_67, %c0_68] : memref<64x32xf32, #tpu.memory_space<vmem>>, vector<8x32xf32>
    tpu.vector_store %arg13[%c32_67, %c0_68], %267 {strides = array<i32>} : memref<64x32xf32, #tpu.memory_space<vmem>>, vector<8x32xf32>,
    %cst_69 = arith.constant dense<0.000000e+00> : vector<8x128xf32>
    %269 = tpu.matmul %267, %171, %cst_69 {dimension_numbers = #tpu.dot_dimension_numbers<[1], [0], [0], [1], [0, 0, 1, 1], [], []>} : vector<8x32xf32>, vector<32x128xf32>, vector<8x128xf32> -> vector<8x128xf32>
    %270 = arith.addf %170, %269 : vector<8x128xf32>
    %271 = vector.extract_strided_slice %270 {offsets = [0, 0], sizes = [8, 96], strides = [1, 1]} : vector<8x128xf32> to vector<8x96xf32>
    %272 = arith.negf %271 : vector<8x96xf32>
    %273 = math.exp %272 : vector<8x96xf32>
    %cst_70 = arith.constant 1.000000e+00 : f32
    %274 = vector.broadcast %cst_70 : f32 to vector<8x96xf32>
    %275 = arith.addf %274, %273 : vector<8x96xf32>
    %276 = arith.divf %274, %275 : vector<8x96xf32>
    %277 = vector.extract_strided_slice %270 {offsets = [0, 96], sizes = [8, 32], strides = [1, 1]} : vector<8x128xf32> to vector<8x32xf32>
    %278 = math.tanh %277 : vector<8x32xf32>
    %279 = vector.extract_strided_slice %276 {offsets = [0, 32], sizes = [8, 32], strides = [1, 1]} : vector<8x96xf32> to vector<8x32xf32>
    %280 = arith.mulf %279, %264 : vector<8x32xf32>
    %281 = vector.extract_strided_slice %276 {offsets = [0, 0], sizes = [8, 32], strides = [1, 1]} : vector<8x96xf32> to vector<8x32xf32>
    %282 = arith.mulf %281, %278 : vector<8x32xf32>
    %283 = arith.addf %280, %282 : vector<8x32xf32>
    %284 = vector.extract_strided_slice %276 {offsets = [0, 64], sizes = [8, 32], strides = [1, 1]} : vector<8x96xf32> to vector<8x32xf32>
    %285 = math.tanh %283 : vector<8x32xf32>
    %286 = arith.mulf %284, %285 : vector<8x32xf32>
    %c40_71 = arith.constant 40 : index
    %c0_72 = arith.constant 0 : index
    %287 = vector.load %arg13[%c40_71, %c0_72] : memref<64x32xf32, #tpu.memory_space<vmem>>, vector<8x32xf32>
    tpu.vector_store %arg13[%c40_71, %c0_72], %286 {strides = array<i32>} : memref<64x32xf32, #tpu.memory_space<vmem>>, vector<8x32xf32>,
    %cst_73 = arith.constant dense<0.000000e+00> : vector<8x128xf32>
    %288 = tpu.matmul %286, %171, %cst_73 {dimension_numbers = #tpu.dot_dimension_numbers<[1], [0], [0], [1], [0, 0, 1, 1], [], []>} : vector<8x32xf32>, vector<32x128xf32>, vector<8x128xf32> -> vector<8x128xf32>
    %289 = arith.addf %170, %288 : vector<8x128xf32>
    %290 = vector.extract_strided_slice %289 {offsets = [0, 0], sizes = [8, 96], strides = [1, 1]} : vector<8x128xf32> to vector<8x96xf32>
    %291 = arith.negf %290 : vector<8x96xf32>
    %292 = math.exp %291 : vector<8x96xf32>
    %cst_74 = arith.constant 1.000000e+00 : f32
    %293 = vector.broadcast %cst_74 : f32 to vector<8x96xf32>
    %294 = arith.addf %293, %292 : vector<8x96xf32>
    %295 = arith.divf %293, %294 : vector<8x96xf32>
    %296 = vector.extract_strided_slice %289 {offsets = [0, 96], sizes = [8, 32], strides = [1, 1]} : vector<8x128xf32> to vector<8x32xf32>
    %297 = math.tanh %296 : vector<8x32xf32>
    %298 = vector.extract_strided_slice %295 {offsets = [0, 32], sizes = [8, 32], strides = [1, 1]} : vector<8x96xf32> to vector<8x32xf32>
    %299 = arith.mulf %298, %283 : vector<8x32xf32>
    %300 = vector.extract_strided_slice %295 {offsets = [0, 0], sizes = [8, 32], strides = [1, 1]} : vector<8x96xf32> to vector<8x32xf32>
    %301 = arith.mulf %300, %297 : vector<8x32xf32>
    %302 = arith.addf %299, %301 : vector<8x32xf32>
    %303 = vector.extract_strided_slice %295 {offsets = [0, 64], sizes = [8, 32], strides = [1, 1]} : vector<8x96xf32> to vector<8x32xf32>
    %304 = math.tanh %302 : vector<8x32xf32>
    %305 = arith.mulf %303, %304 : vector<8x32xf32>
    %c48_75 = arith.constant 48 : index
    %c0_76 = arith.constant 0 : index
    %306 = vector.load %arg13[%c48_75, %c0_76] : memref<64x32xf32, #tpu.memory_space<vmem>>, vector<8x32xf32>
    tpu.vector_store %arg13[%c48_75, %c0_76], %305 {strides = array<i32>} : memref<64x32xf32, #tpu.memory_space<vmem>>, vector<8x32xf32>,
    %cst_77 = arith.constant dense<0.000000e+00> : vector<8x128xf32>
    %307 = tpu.matmul %305, %171, %cst_77 {dimension_numbers = #tpu.dot_dimension_numbers<[1], [0], [0], [1], [0, 0, 1, 1], [], []>} : vector<8x32xf32>, vector<32x128xf32>, vector<8x128xf32> -> vector<8x128xf32>
    %308 = arith.addf %170, %307 : vector<8x128xf32>
    %309 = vector.extract_strided_slice %308 {offsets = [0, 0], sizes = [8, 96], strides = [1, 1]} : vector<8x128xf32> to vector<8x96xf32>
    %310 = arith.negf %309 : vector<8x96xf32>
    %311 = math.exp %310 : vector<8x96xf32>
    %cst_78 = arith.constant 1.000000e+00 : f32
    %312 = vector.broadcast %cst_78 : f32 to vector<8x96xf32>
    %313 = arith.addf %312, %311 : vector<8x96xf32>
    %314 = arith.divf %312, %313 : vector<8x96xf32>
    %315 = vector.extract_strided_slice %308 {offsets = [0, 96], sizes = [8, 32], strides = [1, 1]} : vector<8x128xf32> to vector<8x32xf32>
    %316 = math.tanh %315 : vector<8x32xf32>
    %317 = vector.extract_strided_slice %314 {offsets = [0, 32], sizes = [8, 32], strides = [1, 1]} : vector<8x96xf32> to vector<8x32xf32>
    %318 = arith.mulf %317, %302 : vector<8x32xf32>
    %319 = vector.extract_strided_slice %314 {offsets = [0, 0], sizes = [8, 32], strides = [1, 1]} : vector<8x96xf32> to vector<8x32xf32>
    %320 = arith.mulf %319, %316 : vector<8x32xf32>
    %321 = arith.addf %318, %320 : vector<8x32xf32>
    %322 = vector.extract_strided_slice %314 {offsets = [0, 64], sizes = [8, 32], strides = [1, 1]} : vector<8x96xf32> to vector<8x32xf32>
    %323 = math.tanh %321 : vector<8x32xf32>
    %324 = arith.mulf %322, %323 : vector<8x32xf32>
    %c56_79 = arith.constant 56 : index
    %c0_80 = arith.constant 0 : index
    %325 = vector.load %arg13[%c56_79, %c0_80] : memref<64x32xf32, #tpu.memory_space<vmem>>, vector<8x32xf32>
    tpu.vector_store %arg13[%c56_79, %c0_80], %324 {strides = array<i32>} : memref<64x32xf32, #tpu.memory_space<vmem>>, vector<8x32xf32>,
    %c0_81 = arith.constant 0 : index
    %c0_82 = arith.constant 0 : index
    %326 = vector.load %arg13[%c0_81, %c0_82] : memref<64x32xf32, #tpu.memory_space<vmem>>, vector<64x32xf32>
    %c0_83 = arith.constant 0 : index
    %c0_84 = arith.constant 0 : index
    %327 = vector.load %arg8[%c0_83, %c0_84] : memref<32x4xf32, #tpu.memory_space<vmem>>, vector<32x4xf32>
    %cst_85 = arith.constant dense<0.000000e+00> : vector<64x4xf32>
    %328 = tpu.matmul %326, %327, %cst_85 {dimension_numbers = #tpu.dot_dimension_numbers<[1], [0], [0], [1], [0, 0, 1, 1], [], []>} : vector<64x32xf32>, vector<32x4xf32>, vector<64x4xf32> -> vector<64x4xf32>
    %c0_86 = arith.constant 0 : index
    %c0_87 = arith.constant 0 : index
    %329 = vector.load %arg9[%c0_86, %c0_87] : memref<1x4xf32, #tpu.memory_space<vmem>>, vector<1x4xf32>
    %330 = vector.broadcast %329 : vector<1x4xf32> to vector<64x4xf32>
    %331 = arith.addf %328, %330 : vector<64x4xf32>
    %c0_88 = arith.constant 0 : index
    %c0_89 = arith.constant 0 : index
    %c0_90 = arith.constant 0 : index
    %332 = vector.load %arg10[%c0_88, %c0_89, %c0_90] : memref<1x64x4xf32, #tpu.memory_space<vmem>>, vector<1x64x4xf32>
    %333 = vector.shape_cast %332 : vector<1x64x4xf32> to vector<64x4xf32>
    %334 = vector.shape_cast %331 : vector<64x4xf32> to vector<1x64x4xf32>
    tpu.vector_store %arg10[%c0_88, %c0_89, %c0_90], %334 {strides = array<i32>} : memref<1x64x4xf32, #tpu.memory_space<vmem>>, vector<1x64x4xf32>,
    return
  }
  func.func @transform_0(%arg0: i32) -> (i32, i32, i32) {
    %c0_i32 = arith.constant 0 : i32
    %c0_i32_0 = arith.constant 0 : i32
    %c0_i32_1 = arith.constant 0 : i32
    return %arg0, %c0_i32, %c0_i32_0 : i32, i32, i32
  }
  func.func @transform_1(%arg0: i32) -> (i32, i32) {
    %c0_i32 = arith.constant 0 : i32
    %c0_i32_0 = arith.constant 0 : i32
    %c0_i32_1 = arith.constant 0 : i32
    return %c0_i32, %c0_i32_0 : i32, i32
  }
  func.func @transform_2(%arg0: i32) -> (i32, i32) {
    %c0_i32 = arith.constant 0 : i32
    %c0_i32_0 = arith.constant 0 : i32
    %c0_i32_1 = arith.constant 0 : i32
    return %c0_i32, %c0_i32_0 : i32, i32
  }
  func.func @transform_3(%arg0: i32) -> (i32, i32) {
    %c0_i32 = arith.constant 0 : i32
    %c0_i32_0 = arith.constant 0 : i32
    %c0_i32_1 = arith.constant 0 : i32
    return %c0_i32, %c0_i32_0 : i32, i32
  }
  func.func @transform_4(%arg0: i32) -> (i32, i32) {
    %c0_i32 = arith.constant 0 : i32
    %c0_i32_0 = arith.constant 0 : i32
    %c0_i32_1 = arith.constant 0 : i32
    return %c0_i32, %c0_i32_0 : i32, i32
  }
  func.func @transform_5(%arg0: i32) -> (i32, i32) {
    %c0_i32 = arith.constant 0 : i32
    %c0_i32_0 = arith.constant 0 : i32
    %c0_i32_1 = arith.constant 0 : i32
    return %c0_i32, %c0_i32_0 : i32, i32
  }
  func.func @transform_6(%arg0: i32) -> (i32, i32) {
    %c0_i32 = arith.constant 0 : i32
    %c0_i32_0 = arith.constant 0 : i32
    %c0_i32_1 = arith.constant 0 : i32
    return %c0_i32, %c0_i32_0 : i32, i32
  }
  func.func @transform_7(%arg0: i32) -> (i32, i32) {
    %c0_i32 = arith.constant 0 : i32
    %c0_i32_0 = arith.constant 0 : i32
    %c0_i32_1 = arith.constant 0 : i32
    return %c0_i32, %c0_i32_0 : i32, i32
  }
  func.func @transform_8(%arg0: i32) -> (i32, i32) {
    %c0_i32 = arith.constant 0 : i32
    %c0_i32_0 = arith.constant 0 : i32
    %c0_i32_1 = arith.constant 0 : i32
    return %c0_i32, %c0_i32_0 : i32, i32
  }
  func.func @transform_9(%arg0: i32) -> (i32, i32, i32) {
    %c0_i32 = arith.constant 0 : i32
    %c0_i32_0 = arith.constant 0 : i32
    %c0_i32_1 = arith.constant 0 : i32
    return %arg0, %c0_i32, %c0_i32_0 : i32, i32, i32
  }
  func.func @transform_10(%arg0: i32) -> (i32, i32, i32) {
    %c0_i32 = arith.constant 0 : i32
    %c0_i32_0 = arith.constant 0 : i32
    %c0_i32_1 = arith.constant 0 : i32
    return %arg0, %c0_i32, %c0_i32_0 : i32, i32, i32
  }
}

</mosaic_0001>

<llo_original>
// kernel: tpu_custom_call.1
$region0: #{tpu_custom_call.1}
  #allocation0 [shape = 'u32[]', space=smem, size = 0x4, offset = 0x4, fixed_abs, tag = 'smem constant byte address 0x4 - core index']
  #allocation1 [shape = 'u32[72,128]{1,0:T(1,128)}', space=vmem, size = 0x9000, scoped, tag = 'internal scratch']
  #allocation2 [shape = 'f32[64,256]{1,0:T(8,128)}', space=vmem, size = 0x10000, scoped, tag = 'scratch operand']
  #allocation3 [shape = 'f32[64,32]{1,0:T(8,128)}', space=vmem, size = 0x8000, scoped, tag = 'scratch operand']
  %s0 = inlined_call_operand.vmem [shape: f32[1,64,8], index: 0, kind: input, shape index: {}]
  %s1 = inlined_call_operand.hbm [shape: f32[8,256], index: 1, kind: input, shape index: {}]
  %s2 = inlined_call_operand.hbm [shape: f32[64,256], index: 2, kind: input, shape index: {}]
  %s3 = inlined_call_operand.vmem [shape: f32[1,256], index: 3, kind: input, shape index: {}]
  %s4 = inlined_call_operand.vmem [shape: f32[64,128], index: 4, kind: input, shape index: {}]
  %s5 = inlined_call_operand.vmem [shape: f32[32,128], index: 5, kind: input, shape index: {}]
  %s6 = inlined_call_operand.vmem [shape: f32[1,128], index: 6, kind: input, shape index: {}]
  %s7 = inlined_call_operand.vmem [shape: f32[32,4], index: 7, kind: input, shape index: {}]
  %s8 = inlined_call_operand.vmem [shape: f32[1,4], index: 8, kind: input, shape index: {}]
  %s9 = inlined_call_operand.vmem [shape: f32[1,64,4], index: 9, kind: output, shape index: {0}]
  %s10 = inlined_call_operand.hbm [shape: f32[1,8,64], index: 10, kind: output, shape index: {1}]
  %11 = xla_tuple %s9, %s10
  %s12 = sld [smem:[#allocation0]]
  $region62: #{tpu_custom_call.1} parent=0
    _
  %s14 = ssub.s32 1, %s12
  %s15 = scalar_select 0, %s14, %s12
  $region1: #{tpu_custom_call.1} parent=0
    #allocation4 [shape = 'u8[8192]{0}', space=vmem, size = 0x2000, scoped, tag = 'input window, operand 1, single buffered']
    #allocation5 [shape = 's32[1]{0}', space=sflag, size = 0x4, scoped, tag = 'scoped memory for tpu_custom_call.1']
    #allocation6 [shape = 's32[1]{0}', space=sflag, size = 0x4, scoped, tag = 'scoped memory for tpu_custom_call.1']
    #allocation7 [shape = 'u8[65536]{0}', space=vmem, size = 0x10000, scoped, tag = 'input window, operand 2, single buffered']
    #allocation8 [shape = 's32[1]{0}', space=sflag, size = 0x4, scoped, tag = 'scoped memory for tpu_custom_call.1']
    #allocation9 [shape = 'u8[4096]{0}', space=vmem, size = 0x1000, scoped, tag = 'output window, operand 1, single buffered']
    %16 = vsyncpa [#allocation5], 0
    %17 = vsyncpa [#allocation8], 0
    %18 = vsyncpa [#allocation6], 0
    // Predicated region
    $region2: #{tpu_custom_call.1} parent=1 // pred_check
      _
    $region3: #{tpu_custom_call.1} parent=1 // pred_check_branch
      %20 = sbr.rel (0) target = $region5
    $region4: #{tpu_custom_call.1} parent=1 // pred_region
      _
    $region5: #{tpu_custom_call.1} parent=1 // pred_fallthru
      _
    // Predicated region
    $region6: #{tpu_custom_call.1} parent=1 // pred_check
      _
    $region7: #{tpu_custom_call.1} parent=1 // pred_check_branch
      %22 = sbr.rel (0) target = $region9
    $region8: #{tpu_custom_call.1} parent=1 // pred_region
      %24 = vsyncadd [#allocation5], 0
      %s26 = sshll.u32 %s1, 4
      %s27 = int_to_ptr.hbm [resolvable:$true] %s26
      %s28 = sshll.u32 [#allocation4], 4
      %s29 = int_to_ptr.vmem [resolvable:$true] %s28
      %31 = dma.hbm_to_vmem [thread:$0]  %s27, 256, %s29, [#allocation5]
    $region9: #{tpu_custom_call.1} parent=1 // pred_fallthru
      _
    // Predicated region
    $region10: #{tpu_custom_call.1} parent=1 // pred_check
      _
    $region11: #{tpu_custom_call.1} parent=1 // pred_check_branch
      %33 = sbr.rel (0) target = $region13
    $region12: #{tpu_custom_call.1} parent=1 // pred_region
      %35 = vsyncadd [#allocation8], 0
      %s36 = sshll.u32 %s2, 4
      %s37 = int_to_ptr.hbm [resolvable:$true] %s36
      %s38 = sshll.u32 [#allocation7], 4
      %s39 = int_to_ptr.vmem [resolvable:$true] %s38
      %44 = dma.hbm_to_vmem [thread:$0]  %s37, 2048, %s39, [#allocation8], 256, 256, 16
    $region13: #{tpu_custom_call.1} parent=1 // pred_fallthru
      _
    // Predicated region
    $region14: #{tpu_custom_call.1} parent=1 // pred_check
      _
    $region15: #{tpu_custom_call.1} parent=1 // pred_check_branch
      %46 = sbr.rel (0) target = $region17
    $region16: #{tpu_custom_call.1} parent=1 // pred_region
      _
    $region17: #{tpu_custom_call.1} parent=1 // pred_fallthru
      _
    // Predicated region
    $region18: #{tpu_custom_call.1} parent=1 // pred_check
      _
    $region19: #{tpu_custom_call.1} parent=1 // pred_check_branch
      %48 = sbr.rel (0) target = $region21
    $region20: #{tpu_custom_call.1} parent=1 // pred_region
      _
    $region21: #{tpu_custom_call.1} parent=1 // pred_fallthru
      _
    // Predicated region
    $region22: #{tpu_custom_call.1} parent=1 // pred_check
      _
    $region23: #{tpu_custom_call.1} parent=1 // pred_check_branch
      %50 = sbr.rel (0) target = $region25
    $region24: #{tpu_custom_call.1} parent=1 // pred_region
      _
    $region25: #{tpu_custom_call.1} parent=1 // pred_fallthru
      _
    // Predicated region
    $region26: #{tpu_custom_call.1} parent=1 // pred_check
      _
    $region27: #{tpu_custom_call.1} parent=1 // pred_check_branch
      %52 = sbr.rel (0) target = $region29
    $region28: #{tpu_custom_call.1} parent=1 // pred_region
      _
    $region29: #{tpu_custom_call.1} parent=1 // pred_fallthru
      _
    // Predicated region
    $region30: #{tpu_custom_call.1} parent=1 // pred_check
      _
    $region31: #{tpu_custom_call.1} parent=1 // pred_check_branch
      %54 = sbr.rel (0) target = $region33
    $region32: #{tpu_custom_call.1} parent=1 // pred_region
      _
    $region33: #{tpu_custom_call.1} parent=1 // pred_fallthru
      _
    // Predicated region
    $region34: #{tpu_custom_call.1} parent=1 // pred_check
      _
    $region35: #{tpu_custom_call.1} parent=1 // pred_check_branch
      %56 = sbr.rel (0) target = $region37
    $region36: #{tpu_custom_call.1} parent=1 // pred_region
      _
    $region37: #{tpu_custom_call.1} parent=1 // pred_fallthru
      _
    // Predicated region
    $region38: #{tpu_custom_call.1} parent=1 // pred_check
      _
    $region39: #{tpu_custom_call.1} parent=1 // pred_check_branch
      %58 = sbr.rel (0) target = $region41
    $region40: #{tpu_custom_call.1} parent=1 // pred_region
      %60 = dma.done [#allocation5], 256
    $region41: #{tpu_custom_call.1} parent=1 // pred_fallthru
      _
    // Predicated region
    $region42: #{tpu_custom_call.1} parent=1 // pred_check
      _
    $region43: #{tpu_custom_call.1} parent=1 // pred_check_branch
      %62 = sbr.rel (0) target = $region45
    $region44: #{tpu_custom_call.1} parent=1 // pred_region
      %64 = dma.done [#allocation8], 2048
    $region45: #{tpu_custom_call.1} parent=1 // pred_fallthru
      _
    %v65 = vld [vmem:[%s0] sm:$0xff]
    %v66 = vld [vmem:[%s0 + $0x8] sm:$0xff]
    %v67 = vld [vmem:[%s0 + $0x10] sm:$0xff]
    %v68 = vld [vmem:[%s0 + $0x18] sm:$0xff]
    %v69 = vld [vmem:[%s0 + $0x20] sm:$0xff]
    %v70 = vld [vmem:[%s0 + $0x28] sm:$0xff]
    %v71 = vld [vmem:[%s0 + $0x30] sm:$0xff]
    %v72 = vld [vmem:[%s0 + $0x38] sm:$0xff]
    %v73 = vld [vmem:[#allocation4] sm:$0xff]
    %v74 = vld [vmem:[#allocation4 + $0x8] sm:$0xff]
    %v75 = vld [vmem:[%s3] sm:$0x3]
    %v77 = vperm.slane %v75, 0
    %v78 = vperm.slane %v75, 1
    %vm81 = vcmask 64512
    %v83 = vsel %vm81, %v65, 0
    %v86 = vsel %vm81, %v66, 0
    %v89 = vsel %vm81, %v67, 0
    %v92 = vsel %vm81, %v68, 0
    %v95 = vsel %vm81, %v69, 0
    %v98 = vsel %vm81, %v70, 0
    %v101 = vsel %vm81, %v71, 0
    %v104 = vsel %vm81, %v72, 0
    %106 = vmatpush.msra.mxu0 0.0
    %107 = vmatpush.msra.mxu0 0.0
    %108 = vmatpush.msra.mxu0 0.0
    %109 = vmatpush.msra.mxu0 0.0
    %110 = vmatpush.msra.mxu0 0.0
    %111 = vmatpush.msra.mxu0 0.0
    %112 = vmatpush.msra.mxu0 0.0
    %113 = vmatpush.msra.mxu0 0.0
    %114 = vmatpush.msra.mxu0 0.0
    %115 = vmatpush.msra.mxu0 0.0
    %116 = vmatpush.msra.mxu0 0.0
    %117 = vmatpush.msra.mxu0 0.0
    %118 = vmatpush.msra.mxu0 0.0
    %119 = vmatpush.msra.mxu0 0.0
    %120 = vmatpush.msra.mxu0 0.0
    %121 = vmatpush.msra.mxu0 %v73
    %122 = vmatmul.f32.gmra.mxu0 %v83
    %v123 = vpop.f32.mrf.mxu0
    %v124 = vadd.f32 %v77, %v123
    %125 = vmatmul.f32.gmra.mxu0 %v86
    %v126 = vpop.f32.mrf.mxu0
    %v127 = vadd.f32 %v77, %v126
    %128 = vmatmul.f32.gmra.mxu0 %v89
    %v129 = vpop.f32.mrf.mxu0
    %v130 = vadd.f32 %v77, %v129
    %131 = vmatmul.f32.gmra.mxu0 %v92
    %v132 = vpop.f32.mrf.mxu0
    %v133 = vadd.f32 %v77, %v132
    %134 = vmatmul.f32.gmra.mxu0 %v95
    %v135 = vpop.f32.mrf.mxu0
    %v136 = vadd.f32 %v77, %v135
    %137 = vmatmul.f32.gmra.mxu0 %v98
    %v138 = vpop.f32.mrf.mxu0
    %v139 = vadd.f32 %v77, %v138
    %140 = vmatmul.f32.gmra.mxu0 %v101
    %v141 = vpop.f32.mrf.mxu0
    %v142 = vadd.f32 %v77, %v141
    %143 = vmatmul.f32.gmra.mxu0 %v104
    %v144 = vpop.f32.mrf.mxu0
    %v145 = vadd.f32 %v77, %v144
    %146 = vdwg.mxu0
    %147 = vmatpush.msra.mxu0 0.0
    %148 = vmatpush.msra.mxu0 0.0
    %149 = vmatpush.msra.mxu0 0.0
    %150 = vmatpush.msra.mxu0 0.0
    %151 = vmatpush.msra.mxu0 0.0
    %152 = vmatpush.msra.mxu0 0.0
    %153 = vmatpush.msra.mxu0 0.0
    %154 = vmatpush.msra.mxu0 0.0
    %155 = vmatpush.msra.mxu0 0.0
    %156 = vmatpush.msra.mxu0 0.0
    %157 = vmatpush.msra.mxu0 0.0
    %158 = vmatpush.msra.mxu0 0.0
    %159 = vmatpush.msra.mxu0 0.0
    %160 = vmatpush.msra.mxu0 0.0
    %161 = vmatpush.msra.mxu0 0.0
    %162 = vmatpush.msra.mxu0 %v74
    %163 = vmatmul.f32.gmra.mxu0 %v83
    %v164 = vpop.f32.mrf.mxu0
    %v165 = vadd.f32 %v78, %v164
    %166 = vmatmul.f32.gmra.mxu0 %v86
    %v167 = vpop.f32.mrf.mxu0
    %v168 = vadd.f32 %v78, %v167
    %169 = vmatmul.f32.gmra.mxu0 %v89
    %v170 = vpop.f32.mrf.mxu0
    %v171 = vadd.f32 %v78, %v170
    %172 = vmatmul.f32.gmra.mxu0 %v92
    %v173 = vpop.f32.mrf.mxu0
    %v174 = vadd.f32 %v78, %v173
    %175 = vmatmul.f32.gmra.mxu0 %v95
    %v176 = vpop.f32.mrf.mxu0
    %v177 = vadd.f32 %v78, %v176
    %178 = vmatmul.f32.gmra.mxu0 %v98
    %v179 = vpop.f32.mrf.mxu0
    %v180 = vadd.f32 %v78, %v179
    %181 = vmatmul.f32.gmra.mxu0 %v101
    %v182 = vpop.f32.mrf.mxu0
    %v183 = vadd.f32 %v78, %v182
    %184 = vmatmul.f32.gmra.mxu0 %v104
    %v185 = vpop.f32.mrf.mxu0
    %v186 = vadd.f32 %v78, %v185
    %187 = vdwg.mxu0
    %188 = vst [vmem:[#allocation2] sm:$0xff] %v124
    %189 = vst [vmem:[#allocation2 + $0x8] sm:$0xff] %v165
    %190 = vst [vmem:[#allocation2 + $0x10] sm:$0xff] %v127
    %191 = vst [vmem:[#allocation2 + $0x18] sm:$0xff] %v168
    %192 = vst [vmem:[#allocation2 + $0x20] sm:$0xff] %v130
    %193 = vst [vmem:[#allocation2 + $0x28] sm:$0xff] %v171
    %194 = vst [vmem:[#allocation2 + $0x30] sm:$0xff] %v133
    %195 = vst [vmem:[#allocation2 + $0x38] sm:$0xff] %v174
    %196 = vst [vmem:[#allocation2 + $0x40] sm:$0xff] %v136
    %197 = vst [vmem:[#allocation2 + $0x48] sm:$0xff] %v177
    %198 = vst [vmem:[#allocation2 + $0x50] sm:$0xff] %v139
    %199 = vst [vmem:[#allocation2 + $0x58] sm:$0xff] %v180
    %200 = vst [vmem:[#allocation2 + $0x60] sm:$0xff] %v142
    %201 = vst [vmem:[#allocation2 + $0x68] sm:$0xff] %v183
    %202 = vst [vmem:[#allocation2 + $0x70] sm:$0xff] %v145
    %203 = vst [vmem:[#allocation2 + $0x78] sm:$0xff] %v186
    %v204 = vld [vmem:[#allocation7] sm:$0xff]
    %v205 = vld [vmem:[#allocation7 + $0x8] sm:$0xff]
    %v206 = vld [vmem:[#allocation7 + $0x10] sm:$0xff]
    %v207 = vld [vmem:[#allocation7 + $0x18] sm:$0xff]
    %v208 = vld [vmem:[#allocation7 + $0x20] sm:$0xff]
    %v209 = vld [vmem:[#allocation7 + $0x28] sm:$0xff]
    %v210 = vld [vmem:[#allocation7 + $0x30] sm:$0xff]
    %v211 = vld [vmem:[#allocation7 + $0x38] sm:$0xff]
    %v212 = vld [vmem:[#allocation7 + $0x40] sm:$0xff]
    %v213 = vld [vmem:[#allocation7 + $0x48] sm:$0xff]
    %v214 = vld [vmem:[#allocation7 + $0x50] sm:$0xff]
    %v215 = vld [vmem:[#allocation7 + $0x58] sm:$0xff]
    %v216 = vld [vmem:[#allocation7 + $0x60] sm:$0xff]
    %v217 = vld [vmem:[#allocation7 + $0x68] sm:$0xff]
    %v218 = vld [vmem:[#allocation7 + $0x70] sm:$0xff]
    %v219 = vld [vmem:[#allocation7 + $0x78] sm:$0xff]
    %v220 = vld [vmem:[#allocation2] sm:$0xff]
    %v221 = vld [vmem:[#allocation2 + $0x8] sm:$0xff]
    %vm222 = vcmask 523264
    %v224 = vsel %vm222, 0.0, 0
    %226 = vmatpush.msra.mxu0 0.0
    %227 = vmatpush.msra.mxu0 0.0
    %228 = vmatpush.msra.mxu0 0.0
    %229 = vmatpush.msra.mxu0 0.0
    %230 = vmatpush.msra.mxu0 0.0
    %231 = vmatpush.msra.mxu0 0.0
    %232 = vmatpush.msra.mxu0 0.0
    %233 = vmatpush.msra.mxu0 0.0
    %234 = vmatpush.msra.mxu0 %v218
    %235 = vmatpush.msra.mxu0 %v216
    %236 = vmatpush.msra.mxu0 %v214
    %237 = vmatpush.msra.mxu0 %v212
    %238 = vmatpush.msra.mxu0 %v210
    %239 = vmatpush.msra.mxu0 %v208
    %240 = vmatpush.msra.mxu0 %v206
    %241 = vmatpush.msra.mxu0 %v204
    %242 = vmatmul.f32.gmra.mxu0 %v224
    %v243 = vpop.f32.mrf.mxu0
    %v244 = vadd.f32 0.0, %v243
    %245 = vdwg.mxu0
    %246 = vmatpush.msra.mxu0 0.0
    %247 = vmatpush.msra.mxu0 0.0
    %248 = vmatpush.msra.mxu0 0.0
    %249 = vmatpush.msra.mxu0 0.0
    %250 = vmatpush.msra.mxu0 0.0
    %251 = vmatpush.msra.mxu0 0.0
    %252 = vmatpush.msra.mxu0 0.0
    %253 = vmatpush.msra.mxu0 0.0
    %254 = vmatpush.msra.mxu0 %v219
    %255 = vmatpush.msra.mxu0 %v217
    %256 = vmatpush.msra.mxu0 %v215
    %257 = vmatpush.msra.mxu0 %v213
    %258 = vmatpush.msra.mxu0 %v211
    %259 = vmatpush.msra.mxu0 %v209
    %260 = vmatpush.msra.mxu0 %v207
    %261 = vmatpush.msra.mxu0 %v205
    %262 = vmatmul.f32.gmra.mxu0 %v224
    %v263 = vpop.f32.mrf.mxu0
    %v264 = vadd.f32 0.0, %v263
    %265 = vdwg.mxu0
    %v266 = vadd.f32 %v220, %v244
    %v267 = vadd.f32 %v221, %v264
    %v268 = vxor.u32 %v266, 2147483648
    %v269 = vxor.u32 %v267, 2147483648
    %v270 = vmul.f32 %v268, 1.442695
    %v271 = vpow.pop %v270
    %v272 = vmul.f32 %v269, 1.442695
    %v273 = vpow.pop %v272
    %v274 = vadd.f32 %v271, 1.0
    %v275 = vadd.f32 %v273, 1.0
    %v276 = vrcp.pop %v274
    %v277 = vmul.f32 %v274, %v276
    %v278 = vsub.f32 1.0, %v277
    %v279 = vmul.f32 %v276, %v278
    %v280 = vadd.f32 %v276, %v279
    %vm281 = vweird.f32 %v274
    %vm282 = vweird.f32 %v276
    %vm283 = vmor %vm281, %vm282
    %v284 = vsel %vm283, %v276, %v280
    %v285 = vand.u32 2147483647, %v274
    %vm286 = vcmp.eq.f32.partialorder %v285, 8.507059e+37
    %v287 = vand.u32 %v274, 2147483648
    %v288 = vor.u32 1.1754944e-38, %v287
    %v289 = vsel %vm286, %v288, %v284
    %v290 = vmul.f32 1.0, %v289
    %v291 = vrcp.pop %v275
    %v292 = vmul.f32 %v275, %v291
    %v293 = vsub.f32 1.0, %v292
    %v294 = vmul.f32 %v291, %v293
    %v295 = vadd.f32 %v291, %v294
    %vm296 = vweird.f32 %v275
    %vm297 = vweird.f32 %v291
    %vm298 = vmor %vm296, %vm297
    %v299 = vsel %vm298, %v291, %v295
    %v300 = vand.u32 2147483647, %v275
    %vm301 = vcmp.eq.f32.partialorder %v300, 8.507059e+37
    %v302 = vand.u32 %v275, 2147483648
    %v303 = vor.u32 1.1754944e-38, %v302
    %v304 = vsel %vm301, %v303, %v299
    %v305 = vmul.f32 1.0, %v304
    %v306 = vtanh.pop %v267
    %v307 = vmul.f32 %v290, 0.0
    %309 = vrot.lane.b32.xlu0 %v306, 64
    %v310 = vpop.permute.xlu0 %309
    %v312 = vmul.f32 %v290, %v310
    %314 = vrot.lane.b32.xlu0 %v312, 64
    %v315 = vpop.permute.xlu0 %314
    %v317 = vadd.f32 %v307, %v315
    %v318 = vtanh.pop %v317
    %320 = vrot.lane.b32.xlu0 %v318, 64
    %v321 = vpop.permute.xlu0 %320
    %v323 = vmul.f32 %v305, %v321
    %v324 = vld [vmem:[#allocation2 + $0x10] sm:$0xff]
    %v325 = vld [vmem:[#allocation2 + $0x18] sm:$0xff]
    %v327 = vsel %vm222, %v323, 0
    %329 = vmatpush.msra.mxu0 0.0
    %330 = vmatpush.msra.mxu0 0.0
    %331 = vmatpush.msra.mxu0 0.0
    %332 = vmatpush.msra.mxu0 0.0
    %333 = vmatpush.msra.mxu0 0.0
    %334 = vmatpush.msra.mxu0 0.0
    %335 = vmatpush.msra.mxu0 0.0
    %336 = vmatpush.msra.mxu0 0.0
    %337 = vmatpush.msra.mxu0 %v218
    %338 = vmatpush.msra.mxu0 %v216
    %339 = vmatpush.msra.mxu0 %v214
    %340 = vmatpush.msra.mxu0 %v212
    %341 = vmatpush.msra.mxu0 %v210
    %342 = vmatpush.msra.mxu0 %v208
    %343 = vmatpush.msra.mxu0 %v206
    %344 = vmatpush.msra.mxu0 %v204
    %345 = vmatmul.f32.gmra.mxu0 %v327
    %v346 = vpop.f32.mrf.mxu0
    %v347 = vadd.f32 0.0, %v346
    %348 = vdwg.mxu0
    %349 = vmatpush.msra.mxu0 0.0
    %350 = vmatpush.msra.mxu0 0.0
    %351 = vmatpush.msra.mxu0 0.0
    %352 = vmatpush.msra.mxu0 0.0
    %353 = vmatpush.msra.mxu0 0.0
    %354 = vmatpush.msra.mxu0 0.0
    %355 = vmatpush.msra.mxu0 0.0
    %356 = vmatpush.msra.mxu0 0.0
    %357 = vmatpush.msra.mxu0 %v219
    %358 = vmatpush.msra.mxu0 %v217
    %359 = vmatpush.msra.mxu0 %v215
    %360 = vmatpush.msra.mxu0 %v213
    %361 = vmatpush.msra.mxu0 %v211
    %362 = vmatpush.msra.mxu0 %v209
    %363 = vmatpush.msra.mxu0 %v207
    %364 = vmatpush.msra.mxu0 %v205
    %365 = vmatmul.f32.gmra.mxu0 %v327
    %v366 = vpop.f32.mrf.mxu0
    %v367 = vadd.f32 0.0, %v366
    %368 = vdwg.mxu0
    %v369 = vadd.f32 %v324, %v347
    %v370 = vadd.f32 %v325, %v367
    %v371 = vxor.u32 %v369, 2147483648
    %v372 = vxor.u32 %v370, 2147483648
    %v373 = vmul.f32 %v371, 1.442695
    %v374 = vpow.pop %v373
    %v375 = vmul.f32 %v372, 1.442695
    %v376 = vpow.pop %v375
    %v377 = vadd.f32 %v374, 1.0
    %v378 = vadd.f32 %v376, 1.0
    %v379 = vrcp.pop %v377
    %v380 = vmul.f32 %v377, %v379
    %v381 = vsub.f32 1.0, %v380
    %v382 = vmul.f32 %v379, %v381
    %v383 = vadd.f32 %v379, %v382
    %vm384 = vweird.f32 %v377
    %vm385 = vweird.f32 %v379
    %vm386 = vmor %vm384, %vm385
    %v387 = vsel %vm386, %v379, %v383
    %v388 = vand.u32 2147483647, %v377
    %vm389 = vcmp.eq.f32.partialorder %v388, 8.507059e+37
    %v390 = vand.u32 %v377, 2147483648
    %v391 = vor.u32 1.1754944e-38, %v390
    %v392 = vsel %vm389, %v391, %v387
    %v393 = vmul.f32 1.0, %v392
    %v394 = vrcp.pop %v378
    %v395 = vmul.f32 %v378, %v394
    %v396 = vsub.f32 1.0, %v395
    %v397 = vmul.f32 %v394, %v396
    %v398 = vadd.f32 %v394, %v397
    %vm399 = vweird.f32 %v378
    %vm400 = vweird.f32 %v394
    %vm401 = vmor %vm399, %vm400
    %v402 = vsel %vm401, %v394, %v398
    %v403 = vand.u32 2147483647, %v378
    %vm404 = vcmp.eq.f32.partialorder %v403, 8.507059e+37
    %v405 = vand.u32 %v378, 2147483648
    %v406 = vor.u32 1.1754944e-38, %v405
    %v407 = vsel %vm404, %v406, %v402
    %v408 = vmul.f32 1.0, %v407
    %v409 = vtanh.pop %v370
    %v410 = vmul.f32 %v393, %v317
    %412 = vrot.lane.b32.xlu0 %v409, 64
    %v413 = vpop.permute.xlu0 %412
    %v415 = vmul.f32 %v393, %v413
    %417 = vrot.lane.b32.xlu0 %v415, 64
    %v418 = vpop.permute.xlu0 %417
    %v420 = vadd.f32 %v410, %v418
    %v421 = vtanh.pop %v420
    %423 = vrot.lane.b32.xlu0 %v421, 64
    %v424 = vpop.permute.xlu0 %423
    %v426 = vmul.f32 %v408, %v424
    %v427 = vld [vmem:[#allocation2 + $0x20] sm:$0xff]
    %v428 = vld [vmem:[#allocation2 + $0x28] sm:$0xff]
    %v430 = vsel %vm222, %v426, 0
    %432 = vmatpush.msra.mxu0 0.0
    %433 = vmatpush.msra.mxu0 0.0
    %434 = vmatpush.msra.mxu0 0.0
    %435 = vmatpush.msra.mxu0 0.0
    %436 = vmatpush.msra.mxu0 0.0
    %437 = vmatpush.msra.mxu0 0.0
    %438 = vmatpush.msra.mxu0 0.0
    %439 = vmatpush.msra.mxu0 0.0
    %440 = vmatpush.msra.mxu0 %v218
    %441 = vmatpush.msra.mxu0 %v216
    %442 = vmatpush.msra.mxu0 %v214
    %443 = vmatpush.msra.mxu0 %v212
    %444 = vmatpush.msra.mxu0 %v210
    %445 = vmatpush.msra.mxu0 %v208
    %446 = vmatpush.msra.mxu0 %v206
    %447 = vmatpush.msra.mxu0 %v204
    %448 = vmatmul.f32.gmra.mxu0 %v430
    %v449 = vpop.f32.mrf.mxu0
    %v450 = vadd.f32 0.0, %v449
    %451 = vdwg.mxu0
    %452 = vmatpush.msra.mxu0 0.0
    %453 = vmatpush.msra.mxu0 0.0
    %454 = vmatpush.msra.mxu0 0.0
    %455 = vmatpush.msra.mxu0 0.0
    %456 = vmatpush.msra.mxu0 0.0
    %457 = vmatpush.msra.mxu0 0.0
    %458 = vmatpush.msra.mxu0 0.0
    %459 = vmatpush.msra.mxu0 0.0
    %460 = vmatpush.msra.mxu0 %v219
    %461 = vmatpush.msra.mxu0 %v217
    %462 = vmatpush.msra.mxu0 %v215
    %463 = vmatpush.msra.mxu0 %v213
    %464 = vmatpush.msra.mxu0 %v211
    %465 = vmatpush.msra.mxu0 %v209
    %466 = vmatpush.msra.mxu0 %v207
    %467 = vmatpush.msra.mxu0 %v205
    %468 = vmatmul.f32.gmra.mxu0 %v430
    %v469 = vpop.f32.mrf.mxu0
    %v470 = vadd.f32 0.0, %v469
    %471 = vdwg.mxu0
    %v472 = vadd.f32 %v427, %v450
    %v473 = vadd.f32 %v428, %v470
    %v474 = vxor.u32 %v472, 2147483648
    %v475 = vxor.u32 %v473, 2147483648
    %v476 = vmul.f32 %v474, 1.442695
    %v477 = vpow.pop %v476
    %v478 = vmul.f32 %v475, 1.442695
    %v479 = vpow.pop %v478
    %v480 = vadd.f32 %v477, 1.0
    %v481 = vadd.f32 %v479, 1.0
    %v482 = vrcp.pop %v480
    %v483 = vmul.f32 %v480, %v482
    %v484 = vsub.f32 1.0, %v483
    %v485 = vmul.f32 %v482, %v484
    %v486 = vadd.f32 %v482, %v485
    %vm487 = vweird.f32 %v480
    %vm488 = vweird.f32 %v482
    %vm489 = vmor %vm487, %vm488
    %v490 = vsel %vm489, %v482, %v486
    %v491 = vand.u32 2147483647, %v480
    %vm492 = vcmp.eq.f32.partialorder %v491, 8.507059e+37
    %v493 = vand.u32 %v480, 2147483648
    %v494 = vor.u32 1.1754944e-38, %v493
    %v495 = vsel %vm492, %v494, %v490
    %v496 = vmul.f32 1.0, %v495
    %v497 = vrcp.pop %v481
    %v498 = vmul.f32 %v481, %v497
    %v499 = vsub.f32 1.0, %v498
    %v500 = vmul.f32 %v497, %v499
    %v501 = vadd.f32 %v497, %v500
    %vm502 = vweird.f32 %v481
    %vm503 = vweird.f32 %v497
    %vm504 = vmor %vm502, %vm503
    %v505 = vsel %vm504, %v497, %v501
    %v506 = vand.u32 2147483647, %v481
    %vm507 = vcmp.eq.f32.partialorder %v506, 8.507059e+37
    %v508 = vand.u32 %v481, 2147483648
    %v509 = vor.u32 1.1754944e-38, %v508
    %v510 = vsel %vm507, %v509, %v505
    %v511 = vmul.f32 1.0, %v510
    %v512 = vtanh.pop %v473
    %v513 = vmul.f32 %v496, %v420
    %515 = vrot.lane.b32.xlu0 %v512, 64
    %v516 = vpop.permute.xlu0 %515
    %v518 = vmul.f32 %v496, %v516
    %520 = vrot.lane.b32.xlu0 %v518, 64
    %v521 = vpop.permute.xlu0 %520
    %v523 = vadd.f32 %v513, %v521
    %v524 = vtanh.pop %v523
    %526 = vrot.lane.b32.xlu0 %v524, 64
    %v527 = vpop.permute.xlu0 %526
    %v529 = vmul.f32 %v511, %v527
    %v530 = vld [vmem:[#allocation2 + $0x30] sm:$0xff]
    %v531 = vld [vmem:[#allocation2 + $0x38] sm:$0xff]
    %v533 = vsel %vm222, %v529, 0
    %535 = vmatpush.msra.mxu0 0.0
    %536 = vmatpush.msra.mxu0 0.0
    %537 = vmatpush.msra.mxu0 0.0
    %538 = vmatpush.msra.mxu0 0.0
    %539 = vmatpush.msra.mxu0 0.0
    %540 = vmatpush.msra.mxu0 0.0
    %541 = vmatpush.msra.mxu0 0.0
    %542 = vmatpush.msra.mxu0 0.0
    %543 = vmatpush.msra.mxu0 %v218
    %544 = vmatpush.msra.mxu0 %v216
    %545 = vmatpush.msra.mxu0 %v214
    %546 = vmatpush.msra.mxu0 %v212
    %547 = vmatpush.msra.mxu0 %v210
    %548 = vmatpush.msra.mxu0 %v208
    %549 = vmatpush.msra.mxu0 %v206
    %550 = vmatpush.msra.mxu0 %v204
    %551 = vmatmul.f32.gmra.mxu0 %v533
    %v552 = vpop.f32.mrf.mxu0
    %v553 = vadd.f32 0.0, %v552
    %554 = vdwg.mxu0
    %555 = vmatpush.msra.mxu0 0.0
    %556 = vmatpush.msra.mxu0 0.0
    %557 = vmatpush.msra.mxu0 0.0
    %558 = vmatpush.msra.mxu0 0.0
    %559 = vmatpush.msra.mxu0 0.0
    %560 = vmatpush.msra.mxu0 0.0
    %561 = vmatpush.msra.mxu0 0.0
    %562 = vmatpush.msra.mxu0 0.0
    %563 = vmatpush.msra.mxu0 %v219
    %564 = vmatpush.msra.mxu0 %v217
    %565 = vmatpush.msra.mxu0 %v215
    %566 = vmatpush.msra.mxu0 %v213
    %567 = vmatpush.msra.mxu0 %v211
    %568 = vmatpush.msra.mxu0 %v209
    %569 = vmatpush.msra.mxu0 %v207
    %570 = vmatpush.msra.mxu0 %v205
    %571 = vmatmul.f32.gmra.mxu0 %v533
    %v572 = vpop.f32.mrf.mxu0
    %v573 = vadd.f32 0.0, %v572
    %574 = vdwg.mxu0
    %v575 = vadd.f32 %v530, %v553
    %v576 = vadd.f32 %v531, %v573
    %v577 = vxor.u32 %v575, 2147483648
    %v578 = vxor.u32 %v576, 2147483648
    %v579 = vmul.f32 %v577, 1.442695
    %v580 = vpow.pop %v579
    %v581 = vmul.f32 %v578, 1.442695
    %v582 = vpow.pop %v581
    %v583 = vadd.f32 %v580, 1.0
    %v584 = vadd.f32 %v582, 1.0
    %v585 = vrcp.pop %v583
    %v586 = vmul.f32 %v583, %v585
    %v587 = vsub.f32 1.0, %v586
    %v588 = vmul.f32 %v585, %v587
    %v589 = vadd.f32 %v585, %v588
    %vm590 = vweird.f32 %v583
    %vm591 = vweird.f32 %v585
    %vm592 = vmor %vm590, %vm591
    %v593 = vsel %vm592, %v585, %v589
    %v594 = vand.u32 2147483647, %v583
    %vm595 = vcmp.eq.f32.partialorder %v594, 8.507059e+37
    %v596 = vand.u32 %v583, 2147483648
    %v597 = vor.u32 1.1754944e-38, %v596
    %v598 = vsel %vm595, %v597, %v593
    %v599 = vmul.f32 1.0, %v598
    %v600 = vrcp.pop %v584
    %v601 = vmul.f32 %v584, %v600
    %v602 = vsub.f32 1.0, %v601
    %v603 = vmul.f32 %v600, %v602
    %v604 = vadd.f32 %v600, %v603
    %vm605 = vweird.f32 %v584
    %vm606 = vweird.f32 %v600
    %vm607 = vmor %vm605, %vm606
    %v608 = vsel %vm607, %v600, %v604
    %v609 = vand.u32 2147483647, %v584
    %vm610 = vcmp.eq.f32.partialorder %v609, 8.507059e+37
    %v611 = vand.u32 %v584, 2147483648
    %v612 = vor.u32 1.1754944e-38, %v611
    %v613 = vsel %vm610, %v612, %v608
    %v614 = vmul.f32 1.0, %v613
    %v615 = vtanh.pop %v576
    %v616 = vmul.f32 %v599, %v523
    %618 = vrot.lane.b32.xlu0 %v615, 64
    %v619 = vpop.permute.xlu0 %618
    %v621 = vmul.f32 %v599, %v619
    %623 = vrot.lane.b32.xlu0 %v621, 64
    %v624 = vpop.permute.xlu0 %623
    %v626 = vadd.f32 %v616, %v624
    %v627 = vtanh.pop %v626
    %629 = vrot.lane.b32.xlu0 %v627, 64
    %v630 = vpop.permute.xlu0 %629
    %v632 = vmul.f32 %v614, %v630
    %v633 = vld [vmem:[#allocation2 + $0x40] sm:$0xff]
    %v634 = vld [vmem:[#allocation2 + $0x48] sm:$0xff]
    %v636 = vsel %vm222, %v632, 0
    %638 = vmatpush.msra.mxu0 0.0
    %639 = vmatpush.msra.mxu0 0.0
    %640 = vmatpush.msra.mxu0 0.0
    %641 = vmatpush.msra.mxu0 0.0
    %642 = vmatpush.msra.mxu0 0.0
    %643 = vmatpush.msra.mxu0 0.0
    %644 = vmatpush.msra.mxu0 0.0
    %645 = vmatpush.msra.mxu0 0.0
    %646 = vmatpush.msra.mxu0 %v218
    %647 = vmatpush.msra.mxu0 %v216
    %648 = vmatpush.msra.mxu0 %v214
    %649 = vmatpush.msra.mxu0 %v212
    %650 = vmatpush.msra.mxu0 %v210
    %651 = vmatpush.msra.mxu0 %v208
    %652 = vmatpush.msra.mxu0 %v206
    %653 = vmatpush.msra.mxu0 %v204
    %654 = vmatmul.f32.gmra.mxu0 %v636
    %v655 = vpop.f32.mrf.mxu0
    %v656 = vadd.f32 0.0, %v655
    %657 = vdwg.mxu0
    %658 = vmatpush.msra.mxu0 0.0
    %659 = vmatpush.msra.mxu0 0.0
    %660 = vmatpush.msra.mxu0 0.0
    %661 = vmatpush.msra.mxu0 0.0
    %662 = vmatpush.msra.mxu0 0.0
    %663 = vmatpush.msra.mxu0 0.0
    %664 = vmatpush.msra.mxu0 0.0
    %665 = vmatpush.msra.mxu0 0.0
    %666 = vmatpush.msra.mxu0 %v219
    %667 = vmatpush.msra.mxu0 %v217
    %668 = vmatpush.msra.mxu0 %v215
    %669 = vmatpush.msra.mxu0 %v213
    %670 = vmatpush.msra.mxu0 %v211
    %671 = vmatpush.msra.mxu0 %v209
    %672 = vmatpush.msra.mxu0 %v207
    %673 = vmatpush.msra.mxu0 %v205
    %674 = vmatmul.f32.gmra.mxu0 %v636
    %v675 = vpop.f32.mrf.mxu0
    %v676 = vadd.f32 0.0, %v675
    %677 = vdwg.mxu0
    %v678 = vadd.f32 %v633, %v656
    %v679 = vadd.f32 %v634, %v676
    %v680 = vxor.u32 %v678, 2147483648
    %v681 = vxor.u32 %v679, 2147483648
    %v682 = vmul.f32 %v680, 1.442695
    %v683 = vpow.pop %v682
    %v684 = vmul.f32 %v681, 1.442695
    %v685 = vpow.pop %v684
    %v686 = vadd.f32 %v683, 1.0
    %v687 = vadd.f32 %v685, 1.0
    %v688 = vrcp.pop %v686
    %v689 = vmul.f32 %v686, %v688
    %v690 = vsub.f32 1.0, %v689
    %v691 = vmul.f32 %v688, %v690
    %v692 = vadd.f32 %v688, %v691
    %vm693 = vweird.f32 %v686
    %vm694 = vweird.f32 %v688
    %vm695 = vmor %vm693, %vm694
    %v696 = vsel %vm695, %v688, %v692
    %v697 = vand.u32 2147483647, %v686
    %vm698 = vcmp.eq.f32.partialorder %v697, 8.507059e+37
    %v699 = vand.u32 %v686, 2147483648
    %v700 = vor.u32 1.1754944e-38, %v699
    %v701 = vsel %vm698, %v700, %v696
    %v702 = vmul.f32 1.0, %v701
    %v703 = vrcp.pop %v687
    %v704 = vmul.f32 %v687, %v703
    %v705 = vsub.f32 1.0, %v704
    %v706 = vmul.f32 %v703, %v705
    %v707 = vadd.f32 %v703, %v706
    %vm708 = vweird.f32 %v687
    %vm709 = vweird.f32 %v703
    %vm710 = vmor %vm708, %vm709
    %v711 = vsel %vm710, %v703, %v707
    %v712 = vand.u32 2147483647, %v687
    %vm713 = vcmp.eq.f32.partialorder %v712, 8.507059e+37
    %v714 = vand.u32 %v687, 2147483648
    %v715 = vor.u32 1.1754944e-38, %v714
    %v716 = vsel %vm713, %v715, %v711
    %v717 = vmul.f32 1.0, %v716
    %v718 = vtanh.pop %v679
    %v719 = vmul.f32 %v702, %v626
    %721 = vrot.lane.b32.xlu0 %v718, 64
    %v722 = vpop.permute.xlu0 %721
    %v724 = vmul.f32 %v702, %v722
    %726 = vrot.lane.b32.xlu0 %v724, 64
    %v727 = vpop.permute.xlu0 %726
    %v729 = vadd.f32 %v719, %v727
    %v730 = vtanh.pop %v729
    %732 = vrot.lane.b32.xlu0 %v730, 64
    %v733 = vpop.permute.xlu0 %732
    %v735 = vmul.f32 %v717, %v733
    %v736 = vld [vmem:[#allocation2 + $0x50] sm:$0xff]
    %v737 = vld [vmem:[#allocation2 + $0x58] sm:$0xff]
    %v739 = vsel %vm222, %v735, 0
    %741 = vmatpush.msra.mxu0 0.0
    %742 = vmatpush.msra.mxu0 0.0
    %743 = vmatpush.msra.mxu0 0.0
    %744 = vmatpush.msra.mxu0 0.0
    %745 = vmatpush.msra.mxu0 0.0
    %746 = vmatpush.msra.mxu0 0.0
    %747 = vmatpush.msra.mxu0 0.0
    %748 = vmatpush.msra.mxu0 0.0
    %749 = vmatpush.msra.mxu0 %v218
    %750 = vmatpush.msra.mxu0 %v216
    %751 = vmatpush.msra.mxu0 %v214
    %752 = vmatpush.msra.mxu0 %v212
    %753 = vmatpush.msra.mxu0 %v210
    %754 = vmatpush.msra.mxu0 %v208
    %755 = vmatpush.msra.mxu0 %v206
    %756 = vmatpush.msra.mxu0 %v204
    %757 = vmatmul.f32.gmra.mxu0 %v739
    %v758 = vpop.f32.mrf.mxu0
    %v759 = vadd.f32 0.0, %v758
    %760 = vdwg.mxu0
    %761 = vmatpush.msra.mxu0 0.0
    %762 = vmatpush.msra.mxu0 0.0
    %763 = vmatpush.msra.mxu0 0.0
    %764 = vmatpush.msra.mxu0 0.0
    %765 = vmatpush.msra.mxu0 0.0
    %766 = vmatpush.msra.mxu0 0.0
    %767 = vmatpush.msra.mxu0 0.0
    %768 = vmatpush.msra.mxu0 0.0
    %769 = vmatpush.msra.mxu0 %v219
    %770 = vmatpush.msra.mxu0 %v217
    %771 = vmatpush.msra.mxu0 %v215
    %772 = vmatpush.msra.mxu0 %v213
    %773 = vmatpush.msra.mxu0 %v211
    %774 = vmatpush.msra.mxu0 %v209
    %775 = vmatpush.msra.mxu0 %v207
    %776 = vmatpush.msra.mxu0 %v205
    %777 = vmatmul.f32.gmra.mxu0 %v739
    %v778 = vpop.f32.mrf.mxu0
    %v779 = vadd.f32 0.0, %v778
    %780 = vdwg.mxu0
    %v781 = vadd.f32 %v736, %v759
    %v782 = vadd.f32 %v737, %v779
    %v783 = vxor.u32 %v781, 2147483648
    %v784 = vxor.u32 %v782, 2147483648
    %v785 = vmul.f32 %v783, 1.442695
    %v786 = vpow.pop %v785
    %v787 = vmul.f32 %v784, 1.442695
    %v788 = vpow.pop %v787
    %v789 = vadd.f32 %v786, 1.0
    %v790 = vadd.f32 %v788, 1.0
    %v791 = vrcp.pop %v789
    %v792 = vmul.f32 %v789, %v791
    %v793 = vsub.f32 1.0, %v792
    %v794 = vmul.f32 %v791, %v793
    %v795 = vadd.f32 %v791, %v794
    %vm796 = vweird.f32 %v789
    %vm797 = vweird.f32 %v791
    %vm798 = vmor %vm796, %vm797
    %v799 = vsel %vm798, %v791, %v795
    %v800 = vand.u32 2147483647, %v789
    %vm801 = vcmp.eq.f32.partialorder %v800, 8.507059e+37
    %v802 = vand.u32 %v789, 2147483648
    %v803 = vor.u32 1.1754944e-38, %v802
    %v804 = vsel %vm801, %v803, %v799
    %v805 = vmul.f32 1.0, %v804
    %v806 = vrcp.pop %v790
    %v807 = vmul.f32 %v790, %v806
    %v808 = vsub.f32 1.0, %v807
    %v809 = vmul.f32 %v806, %v808
    %v810 = vadd.f32 %v806, %v809
    %vm811 = vweird.f32 %v790
    %vm812 = vweird.f32 %v806
    %vm813 = vmor %vm811, %vm812
    %v814 = vsel %vm813, %v806, %v810
    %v815 = vand.u32 2147483647, %v790
    %vm816 = vcmp.eq.f32.partialorder %v815, 8.507059e+37
    %v817 = vand.u32 %v790, 2147483648
    %v818 = vor.u32 1.1754944e-38, %v817
    %v819 = vsel %vm816, %v818, %v814
    %v820 = vmul.f32 1.0, %v819
    %v821 = vtanh.pop %v782
    %v822 = vmul.f32 %v805, %v729
    %824 = vrot.lane.b32.xlu0 %v821, 64
    %v825 = vpop.permute.xlu0 %824
    %v827 = vmul.f32 %v805, %v825
    %829 = vrot.lane.b32.xlu0 %v827, 64
    %v830 = vpop.permute.xlu0 %829
    %v832 = vadd.f32 %v822, %v830
    %v833 = vtanh.pop %v832
    %835 = vrot.lane.b32.xlu0 %v833, 64
    %v836 = vpop.permute.xlu0 %835
    %v838 = vmul.f32 %v820, %v836
    %v839 = vld [vmem:[#allocation2 + $0x60] sm:$0xff]
    %v840 = vld [vmem:[#allocation2 + $0x68] sm:$0xff]
    %v842 = vsel %vm222, %v838, 0
    %844 = vmatpush.msra.mxu0 0.0
    %845 = vmatpush.msra.mxu0 0.0
    %846 = vmatpush.msra.mxu0 0.0
    %847 = vmatpush.msra.mxu0 0.0
    %848 = vmatpush.msra.mxu0 0.0
    %849 = vmatpush.msra.mxu0 0.0
    %850 = vmatpush.msra.mxu0 0.0
    %851 = vmatpush.msra.mxu0 0.0
    %852 = vmatpush.msra.mxu0 %v218
    %853 = vmatpush.msra.mxu0 %v216
    %854 = vmatpush.msra.mxu0 %v214
    %855 = vmatpush.msra.mxu0 %v212
    %856 = vmatpush.msra.mxu0 %v210
    %857 = vmatpush.msra.mxu0 %v208
    %858 = vmatpush.msra.mxu0 %v206
    %859 = vmatpush.msra.mxu0 %v204
    %860 = vmatmul.f32.gmra.mxu0 %v842
    %v861 = vpop.f32.mrf.mxu0
    %v862 = vadd.f32 0.0, %v861
    %863 = vdwg.mxu0
    %864 = vmatpush.msra.mxu0 0.0
    %865 = vmatpush.msra.mxu0 0.0
    %866 = vmatpush.msra.mxu0 0.0
    %867 = vmatpush.msra.mxu0 0.0
    %868 = vmatpush.msra.mxu0 0.0
    %869 = vmatpush.msra.mxu0 0.0
    %870 = vmatpush.msra.mxu0 0.0
    %871 = vmatpush.msra.mxu0 0.0
    %872 = vmatpush.msra.mxu0 %v219
    %873 = vmatpush.msra.mxu0 %v217
    %874 = vmatpush.msra.mxu0 %v215
    %875 = vmatpush.msra.mxu0 %v213
    %876 = vmatpush.msra.mxu0 %v211
    %877 = vmatpush.msra.mxu0 %v209
    %878 = vmatpush.msra.mxu0 %v207
    %879 = vmatpush.msra.mxu0 %v205
    %880 = vmatmul.f32.gmra.mxu0 %v842
    %v881 = vpop.f32.mrf.mxu0
    %v882 = vadd.f32 0.0, %v881
    %883 = vdwg.mxu0
    %v884 = vadd.f32 %v839, %v862
    %v885 = vadd.f32 %v840, %v882
    %v886 = vxor.u32 %v884, 2147483648
    %v887 = vxor.u32 %v885, 2147483648
    %v888 = vmul.f32 %v886, 1.442695
    %v889 = vpow.pop %v888
    %v890 = vmul.f32 %v887, 1.442695
    %v891 = vpow.pop %v890
    %v892 = vadd.f32 %v889, 1.0
    %v893 = vadd.f32 %v891, 1.0
    %v894 = vrcp.pop %v892
    %v895 = vmul.f32 %v892, %v894
    %v896 = vsub.f32 1.0, %v895
    %v897 = vmul.f32 %v894, %v896
    %v898 = vadd.f32 %v894, %v897
    %vm899 = vweird.f32 %v892
    %vm900 = vweird.f32 %v894
    %vm901 = vmor %vm899, %vm900
    %v902 = vsel %vm901, %v894, %v898
    %v903 = vand.u32 2147483647, %v892
    %vm904 = vcmp.eq.f32.partialorder %v903, 8.507059e+37
    %v905 = vand.u32 %v892, 2147483648
    %v906 = vor.u32 1.1754944e-38, %v905
    %v907 = vsel %vm904, %v906, %v902
    %v908 = vmul.f32 1.0, %v907
    %v909 = vrcp.pop %v893
    %v910 = vmul.f32 %v893, %v909
    %v911 = vsub.f32 1.0, %v910
    %v912 = vmul.f32 %v909, %v911
    %v913 = vadd.f32 %v909, %v912
    %vm914 = vweird.f32 %v893
    %vm915 = vweird.f32 %v909
    %vm916 = vmor %vm914, %vm915
    %v917 = vsel %vm916, %v909, %v913
    %v918 = vand.u32 2147483647, %v893
    %vm919 = vcmp.eq.f32.partialorder %v918, 8.507059e+37
    %v920 = vand.u32 %v893, 2147483648
    %v921 = vor.u32 1.1754944e-38, %v920
    %v922 = vsel %vm919, %v921, %v917
    %v923 = vmul.f32 1.0, %v922
    %v924 = vtanh.pop %v885
    %v925 = vmul.f32 %v908, %v832
    %927 = vrot.lane.b32.xlu0 %v924, 64
    %v928 = vpop.permute.xlu0 %927
    %v930 = vmul.f32 %v908, %v928
    %932 = vrot.lane.b32.xlu0 %v930, 64
    %v933 = vpop.permute.xlu0 %932
    %v935 = vadd.f32 %v925, %v933
    %v936 = vtanh.pop %v935
    %938 = vrot.lane.b32.xlu0 %v936, 64
    %v939 = vpop.permute.xlu0 %938
    %v941 = vmul.f32 %v923, %v939
    %v942 = vld [vmem:[#allocation2 + $0x70] sm:$0xff]
    %v943 = vld [vmem:[#allocation2 + $0x78] sm:$0xff]
    %v945 = vsel %vm222, %v941, 0
    %947 = vmatpush.msra.mxu0 0.0
    %948 = vmatpush.msra.mxu0 0.0
    %949 = vmatpush.msra.mxu0 0.0
    %950 = vmatpush.msra.mxu0 0.0
    %951 = vmatpush.msra.mxu0 0.0
    %952 = vmatpush.msra.mxu0 0.0
    %953 = vmatpush.msra.mxu0 0.0
    %954 = vmatpush.msra.mxu0 0.0
    %955 = vmatpush.msra.mxu0 %v218
    %956 = vmatpush.msra.mxu0 %v216
    %957 = vmatpush.msra.mxu0 %v214
    %958 = vmatpush.msra.mxu0 %v212
    %959 = vmatpush.msra.mxu0 %v210
    %960 = vmatpush.msra.mxu0 %v208
    %961 = vmatpush.msra.mxu0 %v206
    %962 = vmatpush.msra.mxu0 %v204
    %963 = vmatmul.f32.gmra.mxu0 %v945
    %v964 = vpop.f32.mrf.mxu0
    %v965 = vadd.f32 0.0, %v964
    %966 = vdwg.mxu0
    %967 = vmatpush.msra.mxu0 0.0
    %968 = vmatpush.msra.mxu0 0.0
    %969 = vmatpush.msra.mxu0 0.0
    %970 = vmatpush.msra.mxu0 0.0
    %971 = vmatpush.msra.mxu0 0.0
    %972 = vmatpush.msra.mxu0 0.0
    %973 = vmatpush.msra.mxu0 0.0
    %974 = vmatpush.msra.mxu0 0.0
    %975 = vmatpush.msra.mxu0 %v219
    %976 = vmatpush.msra.mxu0 %v217
    %977 = vmatpush.msra.mxu0 %v215
    %978 = vmatpush.msra.mxu0 %v213
    %979 = vmatpush.msra.mxu0 %v211
    %980 = vmatpush.msra.mxu0 %v209
    %981 = vmatpush.msra.mxu0 %v207
    %982 = vmatpush.msra.mxu0 %v205
    %983 = vmatmul.f32.gmra.mxu0 %v945
    %v984 = vpop.f32.mrf.mxu0
    %v985 = vadd.f32 0.0, %v984
    %986 = vdwg.mxu0
    %v987 = vadd.f32 %v942, %v965
    %v988 = vadd.f32 %v943, %v985
    %v989 = vxor.u32 %v987, 2147483648
    %v990 = vxor.u32 %v988, 2147483648
    %v991 = vmul.f32 %v989, 1.442695
    %v992 = vpow.pop %v991
    %v993 = vmul.f32 %v990, 1.442695
    %v994 = vpow.pop %v993
    %v995 = vadd.f32 %v992, 1.0
    %v996 = vadd.f32 %v994, 1.0
    %v997 = vrcp.pop %v995
    %v998 = vmul.f32 %v995, %v997
    %v999 = vsub.f32 1.0, %v998
    %v1000 = vmul.f32 %v997, %v999
    %v1001 = vadd.f32 %v997, %v1000
    %vm1002 = vweird.f32 %v995
    %vm1003 = vweird.f32 %v997
    %vm1004 = vmor %vm1002, %vm1003
    %v1005 = vsel %vm1004, %v997, %v1001
    %v1006 = vand.u32 2147483647, %v995
    %vm1007 = vcmp.eq.f32.partialorder %v1006, 8.507059e+37
    %v1008 = vand.u32 %v995, 2147483648
    %v1009 = vor.u32 1.1754944e-38, %v1008
    %v1010 = vsel %vm1007, %v1009, %v1005
    %v1011 = vmul.f32 1.0, %v1010
    %v1012 = vrcp.pop %v996
    %v1013 = vmul.f32 %v996, %v1012
    %v1014 = vsub.f32 1.0, %v1013
    %v1015 = vmul.f32 %v1012, %v1014
    %v1016 = vadd.f32 %v1012, %v1015
    %vm1017 = vweird.f32 %v996
    %vm1018 = vweird.f32 %v1012
    %vm1019 = vmor %vm1017, %vm1018
    %v1020 = vsel %vm1019, %v1012, %v1016
    %v1021 = vand.u32 2147483647, %v996
    %vm1022 = vcmp.eq.f32.partialorder %v1021, 8.507059e+37
    %v1023 = vand.u32 %v996, 2147483648
    %v1024 = vor.u32 1.1754944e-38, %v1023
    %v1025 = vsel %vm1022, %v1024, %v1020
    %v1026 = vmul.f32 1.0, %v1025
    %v1027 = vtanh.pop %v988
    %v1028 = vmul.f32 %v1011, %v935
    %1030 = vrot.lane.b32.xlu0 %v1027, 64
    %v1031 = vpop.permute.xlu0 %1030
    %v1033 = vmul.f32 %v1011, %v1031
    %1035 = vrot.lane.b32.xlu0 %v1033, 64
    %v1036 = vpop.permute.xlu0 %1035
    %v1038 = vadd.f32 %v1028, %v1036
    %v1039 = vtanh.pop %v1038
    %1041 = vrot.lane.b32.xlu0 %v1039, 64
    %v1042 = vpop.permute.xlu0 %1041
    %v1044 = vmul.f32 %v1026, %v1042
    %1045 = vst.msk [vmem:[#allocation9] sm:$0xff] %vm222, %v1044
    %v1046 = vld [vmem:[%s4] sm:$0xff]
    %v1047 = vld [vmem:[%s4 + $0x8] sm:$0xff]
    %v1048 = vld [vmem:[%s4 + $0x10] sm:$0xff]
    %v1049 = vld [vmem:[%s4 + $0x18] sm:$0xff]
    %v1050 = vld [vmem:[%s4 + $0x20] sm:$0xff]
    %v1051 = vld [vmem:[%s4 + $0x28] sm:$0xff]
    %v1052 = vld [vmem:[%s4 + $0x30] sm:$0xff]
    %v1053 = vld [vmem:[%s4 + $0x38] sm:$0xff]
    %v1054 = vld [vmem:[%s6] sm:$0x1]
    %v1056 = vperm.slane %v1054, 0
    %v1059 = vsel %vm222, %v1044, 0
    %1061 = vmatpush.msra.mxu0 0.0
    %1062 = vmatpush.msra.mxu0 0.0
    %1063 = vmatpush.msra.mxu0 0.0
    %1064 = vmatpush.msra.mxu0 0.0
    %1065 = vmatpush.msra.mxu0 0.0
    %1066 = vmatpush.msra.mxu0 0.0
    %1067 = vmatpush.msra.mxu0 0.0
    %1068 = vmatpush.msra.mxu0 0.0
    %1069 = vmatpush.msra.mxu0 %v1053
    %1070 = vmatpush.msra.mxu0 %v1052
    %1071 = vmatpush.msra.mxu0 %v1051
    %1072 = vmatpush.msra.mxu0 %v1050
    %1073 = vmatpush.msra.mxu0 %v1049
    %1074 = vmatpush.msra.mxu0 %v1048
    %1075 = vmatpush.msra.mxu0 %v1047
    %1076 = vmatpush.msra.mxu0 %v1046
    %1077 = vmatmul.f32.gmra.mxu0 %v1059
    %v1078 = vpop.f32.mrf.mxu0
    %v1079 = vadd.f32 %v1056, %v1078
    %1080 = vdwg.mxu0
    %v1081 = vld [vmem:[%s5] sm:$0xff]
    %v1082 = vld [vmem:[%s5 + $0x8] sm:$0xff]
    %v1083 = vld [vmem:[%s5 + $0x10] sm:$0xff]
    %v1084 = vld [vmem:[%s5 + $0x18] sm:$0xff]
    %vm1085 = vcmask 261120
    %v1086 = vsel %vm1085, 0.0, 0
    %1088 = vmatpush.msra.mxu0 0.0
    %1089 = vmatpush.msra.mxu0 0.0
    %1090 = vmatpush.msra.mxu0 0.0
    %1091 = vmatpush.msra.mxu0 0.0
    %1092 = vmatpush.msra.mxu0 0.0
    %1093 = vmatpush.msra.mxu0 0.0
    %1094 = vmatpush.msra.mxu0 0.0
    %1095 = vmatpush.msra.mxu0 0.0
    %1096 = vmatpush.msra.mxu0 0.0
    %1097 = vmatpush.msra.mxu0 0.0
    %1098 = vmatpush.msra.mxu0 0.0
    %1099 = vmatpush.msra.mxu0 0.0
    %1100 = vmatpush.msra.mxu0 %v1084
    %1101 = vmatpush.msra.mxu0 %v1083
    %1102 = vmatpush.msra.mxu0 %v1082
    %1103 = vmatpush.msra.mxu0 %v1081
    %1104 = vmatmul.f32.gmra.mxu0 %v1086
    %v1105 = vpop.f32.mrf.mxu0
    %v1106 = vadd.f32 0.0, %v1105
    %1107 = vdwg.mxu0
    %v1108 = vadd.f32 %v1079, %v1106
    %v1109 = vxor.u32 %v1108, 2147483648
    %v1110 = vmul.f32 %v1109, 1.442695
    %v1111 = vpow.pop %v1110
    %v1112 = vadd.f32 %v1111, 1.0
    %v1113 = vrcp.pop %v1112
    %v1114 = vmul.f32 %v1112, %v1113
    %v1115 = vsub.f32 1.0, %v1114
    %v1116 = vmul.f32 %v1113, %v1115
    %v1117 = vadd.f32 %v1113, %v1116
    %vm1118 = vweird.f32 %v1112
    %vm1119 = vweird.f32 %v1113
    %vm1120 = vmor %vm1118, %vm1119
    %v1121 = vsel %vm1120, %v1113, %v1117
    %v1122 = vand.u32 2147483647, %v1112
    %vm1123 = vcmp.eq.f32.partialorder %v1122, 8.507059e+37
    %v1124 = vand.u32 %v1112, 2147483648
    %v1125 = vor.u32 1.1754944e-38, %v1124
    %v1126 = vsel %vm1123, %v1125, %v1121
    %v1127 = vmul.f32 1.0, %v1126
    %v1128 = vtanh.pop %v1108
    %v1129 = vmul.f32 %v1127, 0.0
    %1131 = vrot.lane.b32.xlu0 %v1128, 32
    %v1132 = vpop.permute.xlu0 %1131
    %v1134 = vmul.f32 %v1127, %v1132
    %1136 = vrot.lane.b32.xlu0 %v1134, 32
    %v1137 = vpop.permute.xlu0 %1136
    %v1139 = vadd.f32 %v1129, %v1137
    %v1140 = vtanh.pop %v1139
    %1142 = vrot.lane.b32.xlu0 %v1140, 32
    %v1143 = vpop.permute.xlu0 %1142
    %v1145 = vmul.f32 %v1127, %v1143
    %1147 = vrot.lane.b32.xlu0 %v1145, 64
    %v1148 = vpop.permute.xlu0 %1147
    %1150 = vst.msk [vmem:[#allocation3] sm:$0xff] %vm1085, %v1148
    %v1151 = vsel %vm1085, %v1148, 0
    %1153 = vmatpush.msra.mxu0 0.0
    %1154 = vmatpush.msra.mxu0 0.0
    %1155 = vmatpush.msra.mxu0 0.0
    %1156 = vmatpush.msra.mxu0 0.0
    %1157 = vmatpush.msra.mxu0 0.0
    %1158 = vmatpush.msra.mxu0 0.0
    %1159 = vmatpush.msra.mxu0 0.0
    %1160 = vmatpush.msra.mxu0 0.0
    %1161 = vmatpush.msra.mxu0 0.0
    %1162 = vmatpush.msra.mxu0 0.0
    %1163 = vmatpush.msra.mxu0 0.0
    %1164 = vmatpush.msra.mxu0 0.0
    %1165 = vmatpush.msra.mxu0 %v1084
    %1166 = vmatpush.msra.mxu0 %v1083
    %1167 = vmatpush.msra.mxu0 %v1082
    %1168 = vmatpush.msra.mxu0 %v1081
    %1169 = vmatmul.f32.gmra.mxu0 %v1151
    %v1170 = vpop.f32.mrf.mxu0
    %v1171 = vadd.f32 0.0, %v1170
    %1172 = vdwg.mxu0
    %v1173 = vadd.f32 %v1079, %v1171
    %v1174 = vxor.u32 %v1173, 2147483648
    %v1175 = vmul.f32 %v1174, 1.442695
    %v1176 = vpow.pop %v1175
    %v1177 = vadd.f32 %v1176, 1.0
    %v1178 = vrcp.pop %v1177
    %v1179 = vmul.f32 %v1177, %v1178
    %v1180 = vsub.f32 1.0, %v1179
    %v1181 = vmul.f32 %v1178, %v1180
    %v1182 = vadd.f32 %v1178, %v1181
    %vm1183 = vweird.f32 %v1177
    %vm1184 = vweird.f32 %v1178
    %vm1185 = vmor %vm1183, %vm1184
    %v1186 = vsel %vm1185, %v1178, %v1182
    %v1187 = vand.u32 2147483647, %v1177
    %vm1188 = vcmp.eq.f32.partialorder %v1187, 8.507059e+37
    %v1189 = vand.u32 %v1177, 2147483648
    %v1190 = vor.u32 1.1754944e-38, %v1189
    %v1191 = vsel %vm1188, %v1190, %v1186
    %v1192 = vmul.f32 1.0, %v1191
    %v1193 = vtanh.pop %v1173
    %v1194 = vmul.f32 %v1192, %v1139
    %1196 = vrot.lane.b32.xlu0 %v1193, 32
    %v1197 = vpop.permute.xlu0 %1196
    %v1199 = vmul.f32 %v1192, %v1197
    %1201 = vrot.lane.b32.xlu0 %v1199, 32
    %v1202 = vpop.permute.xlu0 %1201
    %v1204 = vadd.f32 %v1194, %v1202
    %v1205 = vtanh.pop %v1204
    %1207 = vrot.lane.b32.xlu0 %v1205, 32
    %v1208 = vpop.permute.xlu0 %1207
    %v1210 = vmul.f32 %v1192, %v1208
    %1212 = vrot.lane.b32.xlu0 %v1210, 64
    %v1213 = vpop.permute.xlu0 %1212
    %1215 = vst.msk [vmem:[#allocation3 + $0x8] sm:$0xff] %vm1085, %v1213
    %v1216 = vsel %vm1085, %v1213, 0
    %1218 = vmatpush.msra.mxu0 0.0
    %1219 = vmatpush.msra.mxu0 0.0
    %1220 = vmatpush.msra.mxu0 0.0
    %1221 = vmatpush.msra.mxu0 0.0
    %1222 = vmatpush.msra.mxu0 0.0
    %1223 = vmatpush.msra.mxu0 0.0
    %1224 = vmatpush.msra.mxu0 0.0
    %1225 = vmatpush.msra.mxu0 0.0
    %1226 = vmatpush.msra.mxu0 0.0
    %1227 = vmatpush.msra.mxu0 0.0
    %1228 = vmatpush.msra.mxu0 0.0
    %1229 = vmatpush.msra.mxu0 0.0
    %1230 = vmatpush.msra.mxu0 %v1084
    %1231 = vmatpush.msra.mxu0 %v1083
    %1232 = vmatpush.msra.mxu0 %v1082
    %1233 = vmatpush.msra.mxu0 %v1081
    %1234 = vmatmul.f32.gmra.mxu0 %v1216
    %v1235 = vpop.f32.mrf.mxu0
    %v1236 = vadd.f32 0.0, %v1235
    %1237 = vdwg.mxu0
    %v1238 = vadd.f32 %v1079, %v1236
    %v1239 = vxor.u32 %v1238, 2147483648
    %v1240 = vmul.f32 %v1239, 1.442695
    %v1241 = vpow.pop %v1240
    %v1242 = vadd.f32 %v1241, 1.0
    %v1243 = vrcp.pop %v1242
    %v1244 = vmul.f32 %v1242, %v1243
    %v1245 = vsub.f32 1.0, %v1244
    %v1246 = vmul.f32 %v1243, %v1245
    %v1247 = vadd.f32 %v1243, %v1246
    %vm1248 = vweird.f32 %v1242
    %vm1249 = vweird.f32 %v1243
    %vm1250 = vmor %vm1248, %vm1249
    %v1251 = vsel %vm1250, %v1243, %v1247
    %v1252 = vand.u32 2147483647, %v1242
    %vm1253 = vcmp.eq.f32.partialorder %v1252, 8.507059e+37
    %v1254 = vand.u32 %v1242, 2147483648
    %v1255 = vor.u32 1.1754944e-38, %v1254
    %v1256 = vsel %vm1253, %v1255, %v1251
    %v1257 = vmul.f32 1.0, %v1256
    %v1258 = vtanh.pop %v1238
    %v1259 = vmul.f32 %v1257, %v1204
    %1261 = vrot.lane.b32.xlu0 %v1258, 32
    %v1262 = vpop.permute.xlu0 %1261
    %v1264 = vmul.f32 %v1257, %v1262
    %1266 = vrot.lane.b32.xlu0 %v1264, 32
    %v1267 = vpop.permute.xlu0 %1266
    %v1269 = vadd.f32 %v1259, %v1267
    %v1270 = vtanh.pop %v1269
    %1272 = vrot.lane.b32.xlu0 %v1270, 32
    %v1273 = vpop.permute.xlu0 %1272
    %v1275 = vmul.f32 %v1257, %v1273
    %1277 = vrot.lane.b32.xlu0 %v1275, 64
    %v1278 = vpop.permute.xlu0 %1277
    %1280 = vst.msk [vmem:[#allocation3 + $0x10] sm:$0xff] %vm1085, %v1278
    %v1281 = vsel %vm1085, %v1278, 0
    %1283 = vmatpush.msra.mxu0 0.0
    %1284 = vmatpush.msra.mxu0 0.0
    %1285 = vmatpush.msra.mxu0 0.0
    %1286 = vmatpush.msra.mxu0 0.0
    %1287 = vmatpush.msra.mxu0 0.0
    %1288 = vmatpush.msra.mxu0 0.0
    %1289 = vmatpush.msra.mxu0 0.0
    %1290 = vmatpush.msra.mxu0 0.0
    %1291 = vmatpush.msra.mxu0 0.0
    %1292 = vmatpush.msra.mxu0 0.0
    %1293 = vmatpush.msra.mxu0 0.0
    %1294 = vmatpush.msra.mxu0 0.0
    %1295 = vmatpush.msra.mxu0 %v1084
    %1296 = vmatpush.msra.mxu0 %v1083
    %1297 = vmatpush.msra.mxu0 %v1082
    %1298 = vmatpush.msra.mxu0 %v1081
    %1299 = vmatmul.f32.gmra.mxu0 %v1281
    %v1300 = vpop.f32.mrf.mxu0
    %v1301 = vadd.f32 0.0, %v1300
    %1302 = vdwg.mxu0
    %v1303 = vadd.f32 %v1079, %v1301
    %v1304 = vxor.u32 %v1303, 2147483648
    %v1305 = vmul.f32 %v1304, 1.442695
    %v1306 = vpow.pop %v1305
    %v1307 = vadd.f32 %v1306, 1.0
    %v1308 = vrcp.pop %v1307
    %v1309 = vmul.f32 %v1307, %v1308
    %v1310 = vsub.f32 1.0, %v1309
    %v1311 = vmul.f32 %v1308, %v1310
    %v1312 = vadd.f32 %v1308, %v1311
    %vm1313 = vweird.f32 %v1307
    %vm1314 = vweird.f32 %v1308
    %vm1315 = vmor %vm1313, %vm1314
    %v1316 = vsel %vm1315, %v1308, %v1312
    %v1317 = vand.u32 2147483647, %v1307
    %vm1318 = vcmp.eq.f32.partialorder %v1317, 8.507059e+37
    %v1319 = vand.u32 %v1307, 2147483648
    %v1320 = vor.u32 1.1754944e-38, %v1319
    %v1321 = vsel %vm1318, %v1320, %v1316
    %v1322 = vmul.f32 1.0, %v1321
    %v1323 = vtanh.pop %v1303
    %v1324 = vmul.f32 %v1322, %v1269
    %1326 = vrot.lane.b32.xlu0 %v1323, 32
    %v1327 = vpop.permute.xlu0 %1326
    %v1329 = vmul.f32 %v1322, %v1327
    %1331 = vrot.lane.b32.xlu0 %v1329, 32
    %v1332 = vpop.permute.xlu0 %1331
    %v1334 = vadd.f32 %v1324, %v1332
    %v1335 = vtanh.pop %v1334
    %1337 = vrot.lane.b32.xlu0 %v1335, 32
    %v1338 = vpop.permute.xlu0 %1337
    %v1340 = vmul.f32 %v1322, %v1338
    %1342 = vrot.lane.b32.xlu0 %v1340, 64
    %v1343 = vpop.permute.xlu0 %1342
    %1345 = vst.msk [vmem:[#allocation3 + $0x18] sm:$0xff] %vm1085, %v1343
    %v1346 = vsel %vm1085, %v1343, 0
    %1348 = vmatpush.msra.mxu0 0.0
    %1349 = vmatpush.msra.mxu0 0.0
    %1350 = vmatpush.msra.mxu0 0.0
    %1351 = vmatpush.msra.mxu0 0.0
    %1352 = vmatpush.msra.mxu0 0.0
    %1353 = vmatpush.msra.mxu0 0.0
    %1354 = vmatpush.msra.mxu0 0.0
    %1355 = vmatpush.msra.mxu0 0.0
    %1356 = vmatpush.msra.mxu0 0.0
    %1357 = vmatpush.msra.mxu0 0.0
    %1358 = vmatpush.msra.mxu0 0.0
    %1359 = vmatpush.msra.mxu0 0.0
    %1360 = vmatpush.msra.mxu0 %v1084
    %1361 = vmatpush.msra.mxu0 %v1083
    %1362 = vmatpush.msra.mxu0 %v1082
    %1363 = vmatpush.msra.mxu0 %v1081
    %1364 = vmatmul.f32.gmra.mxu0 %v1346
    %v1365 = vpop.f32.mrf.mxu0
    %v1366 = vadd.f32 0.0, %v1365
    %1367 = vdwg.mxu0
    %v1368 = vadd.f32 %v1079, %v1366
    %v1369 = vxor.u32 %v1368, 2147483648
    %v1370 = vmul.f32 %v1369, 1.442695
    %v1371 = vpow.pop %v1370
    %v1372 = vadd.f32 %v1371, 1.0
    %v1373 = vrcp.pop %v1372
    %v1374 = vmul.f32 %v1372, %v1373
    %v1375 = vsub.f32 1.0, %v1374
    %v1376 = vmul.f32 %v1373, %v1375
    %v1377 = vadd.f32 %v1373, %v1376
    %vm1378 = vweird.f32 %v1372
    %vm1379 = vweird.f32 %v1373
    %vm1380 = vmor %vm1378, %vm1379
    %v1381 = vsel %vm1380, %v1373, %v1377
    %v1382 = vand.u32 2147483647, %v1372
    %vm1383 = vcmp.eq.f32.partialorder %v1382, 8.507059e+37
    %v1384 = vand.u32 %v1372, 2147483648
    %v1385 = vor.u32 1.1754944e-38, %v1384
    %v1386 = vsel %vm1383, %v1385, %v1381
    %v1387 = vmul.f32 1.0, %v1386
    %v1388 = vtanh.pop %v1368
    %v1389 = vmul.f32 %v1387, %v1334
    %1391 = vrot.lane.b32.xlu0 %v1388, 32
    %v1392 = vpop.permute.xlu0 %1391
    %v1394 = vmul.f32 %v1387, %v1392
    %1396 = vrot.lane.b32.xlu0 %v1394, 32
    %v1397 = vpop.permute.xlu0 %1396
    %v1399 = vadd.f32 %v1389, %v1397
    %v1400 = vtanh.pop %v1399
    %1402 = vrot.lane.b32.xlu0 %v1400, 32
    %v1403 = vpop.permute.xlu0 %1402
    %v1405 = vmul.f32 %v1387, %v1403
    %1407 = vrot.lane.b32.xlu0 %v1405, 64
    %v1408 = vpop.permute.xlu0 %1407
    %1410 = vst.msk [vmem:[#allocation3 + $0x20] sm:$0xff] %vm1085, %v1408
    %v1411 = vsel %vm1085, %v1408, 0
    %1413 = vmatpush.msra.mxu0 0.0
    %1414 = vmatpush.msra.mxu0 0.0
    %1415 = vmatpush.msra.mxu0 0.0
    %1416 = vmatpush.msra.mxu0 0.0
    %1417 = vmatpush.msra.mxu0 0.0
    %1418 = vmatpush.msra.mxu0 0.0
    %1419 = vmatpush.msra.mxu0 0.0
    %1420 = vmatpush.msra.mxu0 0.0
    %1421 = vmatpush.msra.mxu0 0.0
    %1422 = vmatpush.msra.mxu0 0.0
    %1423 = vmatpush.msra.mxu0 0.0
    %1424 = vmatpush.msra.mxu0 0.0
    %1425 = vmatpush.msra.mxu0 %v1084
    %1426 = vmatpush.msra.mxu0 %v1083
    %1427 = vmatpush.msra.mxu0 %v1082
    %1428 = vmatpush.msra.mxu0 %v1081
    %1429 = vmatmul.f32.gmra.mxu0 %v1411
    %v1430 = vpop.f32.mrf.mxu0
    %v1431 = vadd.f32 0.0, %v1430
    %1432 = vdwg.mxu0
    %v1433 = vadd.f32 %v1079, %v1431
    %v1434 = vxor.u32 %v1433, 2147483648
    %v1435 = vmul.f32 %v1434, 1.442695
    %v1436 = vpow.pop %v1435
    %v1437 = vadd.f32 %v1436, 1.0
    %v1438 = vrcp.pop %v1437
    %v1439 = vmul.f32 %v1437, %v1438
    %v1440 = vsub.f32 1.0, %v1439
    %v1441 = vmul.f32 %v1438, %v1440
    %v1442 = vadd.f32 %v1438, %v1441
    %vm1443 = vweird.f32 %v1437
    %vm1444 = vweird.f32 %v1438
    %vm1445 = vmor %vm1443, %vm1444
    %v1446 = vsel %vm1445, %v1438, %v1442
    %v1447 = vand.u32 2147483647, %v1437
    %vm1448 = vcmp.eq.f32.partialorder %v1447, 8.507059e+37
    %v1449 = vand.u32 %v1437, 2147483648
    %v1450 = vor.u32 1.1754944e-38, %v1449
    %v1451 = vsel %vm1448, %v1450, %v1446
    %v1452 = vmul.f32 1.0, %v1451
    %v1453 = vtanh.pop %v1433
    %v1454 = vmul.f32 %v1452, %v1399
    %1456 = vrot.lane.b32.xlu0 %v1453, 32
    %v1457 = vpop.permute.xlu0 %1456
    %v1459 = vmul.f32 %v1452, %v1457
    %1461 = vrot.lane.b32.xlu0 %v1459, 32
    %v1462 = vpop.permute.xlu0 %1461
    %v1464 = vadd.f32 %v1454, %v1462
    %v1465 = vtanh.pop %v1464
    %1467 = vrot.lane.b32.xlu0 %v1465, 32
    %v1468 = vpop.permute.xlu0 %1467
    %v1470 = vmul.f32 %v1452, %v1468
    %1472 = vrot.lane.b32.xlu0 %v1470, 64
    %v1473 = vpop.permute.xlu0 %1472
    %1475 = vst.msk [vmem:[#allocation3 + $0x28] sm:$0xff] %vm1085, %v1473
    %v1476 = vsel %vm1085, %v1473, 0
    %1478 = vmatpush.msra.mxu0 0.0
    %1479 = vmatpush.msra.mxu0 0.0
    %1480 = vmatpush.msra.mxu0 0.0
    %1481 = vmatpush.msra.mxu0 0.0
    %1482 = vmatpush.msra.mxu0 0.0
    %1483 = vmatpush.msra.mxu0 0.0
    %1484 = vmatpush.msra.mxu0 0.0
    %1485 = vmatpush.msra.mxu0 0.0
    %1486 = vmatpush.msra.mxu0 0.0
    %1487 = vmatpush.msra.mxu0 0.0
    %1488 = vmatpush.msra.mxu0 0.0
    %1489 = vmatpush.msra.mxu0 0.0
    %1490 = vmatpush.msra.mxu0 %v1084
    %1491 = vmatpush.msra.mxu0 %v1083
    %1492 = vmatpush.msra.mxu0 %v1082
    %1493 = vmatpush.msra.mxu0 %v1081
    %1494 = vmatmul.f32.gmra.mxu0 %v1476
    %v1495 = vpop.f32.mrf.mxu0
    %v1496 = vadd.f32 0.0, %v1495
    %1497 = vdwg.mxu0
    %v1498 = vadd.f32 %v1079, %v1496
    %v1499 = vxor.u32 %v1498, 2147483648
    %v1500 = vmul.f32 %v1499, 1.442695
    %v1501 = vpow.pop %v1500
    %v1502 = vadd.f32 %v1501, 1.0
    %v1503 = vrcp.pop %v1502
    %v1504 = vmul.f32 %v1502, %v1503
    %v1505 = vsub.f32 1.0, %v1504
    %v1506 = vmul.f32 %v1503, %v1505
    %v1507 = vadd.f32 %v1503, %v1506
    %vm1508 = vweird.f32 %v1502
    %vm1509 = vweird.f32 %v1503
    %vm1510 = vmor %vm1508, %vm1509
    %v1511 = vsel %vm1510, %v1503, %v1507
    %v1512 = vand.u32 2147483647, %v1502
    %vm1513 = vcmp.eq.f32.partialorder %v1512, 8.507059e+37
    %v1514 = vand.u32 %v1502, 2147483648
    %v1515 = vor.u32 1.1754944e-38, %v1514
    %v1516 = vsel %vm1513, %v1515, %v1511
    %v1517 = vmul.f32 1.0, %v1516
    %v1518 = vtanh.pop %v1498
    %v1519 = vmul.f32 %v1517, %v1464
    %1521 = vrot.lane.b32.xlu0 %v1518, 32
    %v1522 = vpop.permute.xlu0 %1521
    %v1524 = vmul.f32 %v1517, %v1522
    %1526 = vrot.lane.b32.xlu0 %v1524, 32
    %v1527 = vpop.permute.xlu0 %1526
    %v1529 = vadd.f32 %v1519, %v1527
    %v1530 = vtanh.pop %v1529
    %1532 = vrot.lane.b32.xlu0 %v1530, 32
    %v1533 = vpop.permute.xlu0 %1532
    %v1535 = vmul.f32 %v1517, %v1533
    %1537 = vrot.lane.b32.xlu0 %v1535, 64
    %v1538 = vpop.permute.xlu0 %1537
    %1540 = vst.msk [vmem:[#allocation3 + $0x30] sm:$0xff] %vm1085, %v1538
    %v1541 = vsel %vm1085, %v1538, 0
    %1543 = vmatpush.msra.mxu0 0.0
    %1544 = vmatpush.msra.mxu0 0.0
    %1545 = vmatpush.msra.mxu0 0.0
    %1546 = vmatpush.msra.mxu0 0.0
    %1547 = vmatpush.msra.mxu0 0.0
    %1548 = vmatpush.msra.mxu0 0.0
    %1549 = vmatpush.msra.mxu0 0.0
    %1550 = vmatpush.msra.mxu0 0.0
    %1551 = vmatpush.msra.mxu0 0.0
    %1552 = vmatpush.msra.mxu0 0.0
    %1553 = vmatpush.msra.mxu0 0.0
    %1554 = vmatpush.msra.mxu0 0.0
    %1555 = vmatpush.msra.mxu0 %v1084
    %1556 = vmatpush.msra.mxu0 %v1083
    %1557 = vmatpush.msra.mxu0 %v1082
    %1558 = vmatpush.msra.mxu0 %v1081
    %1559 = vmatmul.f32.gmra.mxu0 %v1541
    %v1560 = vpop.f32.mrf.mxu0
    %v1561 = vadd.f32 0.0, %v1560
    %1562 = vdwg.mxu0
    %v1563 = vadd.f32 %v1079, %v1561
    %v1564 = vxor.u32 %v1563, 2147483648
    %v1565 = vmul.f32 %v1564, 1.442695
    %v1566 = vpow.pop %v1565
    %v1567 = vadd.f32 %v1566, 1.0
    %v1568 = vrcp.pop %v1567
    %v1569 = vmul.f32 %v1567, %v1568
    %v1570 = vsub.f32 1.0, %v1569
    %v1571 = vmul.f32 %v1568, %v1570
    %v1572 = vadd.f32 %v1568, %v1571
    %vm1573 = vweird.f32 %v1567
    %vm1574 = vweird.f32 %v1568
    %vm1575 = vmor %vm1573, %vm1574
    %v1576 = vsel %vm1575, %v1568, %v1572
    %v1577 = vand.u32 2147483647, %v1567
    %vm1578 = vcmp.eq.f32.partialorder %v1577, 8.507059e+37
    %v1579 = vand.u32 %v1567, 2147483648
    %v1580 = vor.u32 1.1754944e-38, %v1579
    %v1581 = vsel %vm1578, %v1580, %v1576
    %v1582 = vmul.f32 1.0, %v1581
    %v1583 = vtanh.pop %v1563
    %v1584 = vmul.f32 %v1582, %v1529
    %1586 = vrot.lane.b32.xlu0 %v1583, 32
    %v1587 = vpop.permute.xlu0 %1586
    %v1589 = vmul.f32 %v1582, %v1587
    %1591 = vrot.lane.b32.xlu0 %v1589, 32
    %v1592 = vpop.permute.xlu0 %1591
    %v1594 = vadd.f32 %v1584, %v1592
    %v1595 = vtanh.pop %v1594
    %1597 = vrot.lane.b32.xlu0 %v1595, 32
    %v1598 = vpop.permute.xlu0 %1597
    %v1600 = vmul.f32 %v1582, %v1598
    %1602 = vrot.lane.b32.xlu0 %v1600, 64
    %v1603 = vpop.permute.xlu0 %1602
    %1605 = vst.msk [vmem:[#allocation3 + $0x38] sm:$0xff] %vm1085, %v1603
    %v1606 = vld [vmem:[#allocation3] sm:$0xff]
    %v1607 = vld [vmem:[#allocation3 + $0x8] sm:$0xff]
    %v1608 = vld [vmem:[#allocation3 + $0x10] sm:$0xff]
    %v1609 = vld [vmem:[#allocation3 + $0x18] sm:$0xff]
    %v1610 = vld [vmem:[#allocation3 + $0x20] sm:$0xff]
    %v1611 = vld [vmem:[#allocation3 + $0x28] sm:$0xff]
    %v1612 = vld [vmem:[#allocation3 + $0x30] sm:$0xff]
    %v1613 = vld [vmem:[#allocation3 + $0x38] sm:$0xff]
    %v1614 = vld [vmem:[%s7] sm:$0xff]
    %v1615 = vld [vmem:[%s7 + $0x8] sm:$0xff]
    %v1616 = vld [vmem:[%s7 + $0x10] sm:$0xff]
    %v1617 = vld [vmem:[%s7 + $0x18] sm:$0xff]
    %v1618 = vld [vmem:[%s8] sm:$0x1]
    %v1620 = vperm.slane %v1618, 0
    %v1623 = vsel %vm1085, %v1606, 0
    %v1626 = vsel %vm1085, %v1607, 0
    %v1629 = vsel %vm1085, %v1608, 0
    %v1632 = vsel %vm1085, %v1609, 0
    %v1635 = vsel %vm1085, %v1610, 0
    %v1638 = vsel %vm1085, %v1611, 0
    %v1641 = vsel %vm1085, %v1612, 0
    %v1644 = vsel %vm1085, %v1613, 0
    %1646 = vmatpush.msra.mxu0 0.0
    %1647 = vmatpush.msra.mxu0 0.0
    %1648 = vmatpush.msra.mxu0 0.0
    %1649 = vmatpush.msra.mxu0 0.0
    %1650 = vmatpush.msra.mxu0 0.0
    %1651 = vmatpush.msra.mxu0 0.0
    %1652 = vmatpush.msra.mxu0 0.0
    %1653 = vmatpush.msra.mxu0 0.0
    %1654 = vmatpush.msra.mxu0 0.0
    %1655 = vmatpush.msra.mxu0 0.0
    %1656 = vmatpush.msra.mxu0 0.0
    %1657 = vmatpush.msra.mxu0 0.0
    %1658 = vmatpush.msra.mxu0 %v1617
    %1659 = vmatpush.msra.mxu0 %v1616
    %1660 = vmatpush.msra.mxu0 %v1615
    %1661 = vmatpush.msra.mxu0 %v1614
    %1662 = vmatmul.f32.gmra.mxu0 %v1623
    %v1663 = vpop.f32.mrf.mxu0
    %v1664 = vadd.f32 %v1620, %v1663
    %1665 = vmatmul.f32.gmra.mxu0 %v1626
    %v1666 = vpop.f32.mrf.mxu0
    %v1667 = vadd.f32 %v1620, %v1666
    %1668 = vmatmul.f32.gmra.mxu0 %v1629
    %v1669 = vpop.f32.mrf.mxu0
    %v1670 = vadd.f32 %v1620, %v1669
    %1671 = vmatmul.f32.gmra.mxu0 %v1632
    %v1672 = vpop.f32.mrf.mxu0
    %v1673 = vadd.f32 %v1620, %v1672
    %1674 = vmatmul.f32.gmra.mxu0 %v1635
    %v1675 = vpop.f32.mrf.mxu0
    %v1676 = vadd.f32 %v1620, %v1675
    %1677 = vmatmul.f32.gmra.mxu0 %v1638
    %v1678 = vpop.f32.mrf.mxu0
    %v1679 = vadd.f32 %v1620, %v1678
    %1680 = vmatmul.f32.gmra.mxu0 %v1641
    %v1681 = vpop.f32.mrf.mxu0
    %v1682 = vadd.f32 %v1620, %v1681
    %1683 = vmatmul.f32.gmra.mxu0 %v1644
    %v1684 = vpop.f32.mrf.mxu0
    %v1685 = vadd.f32 %v1620, %v1684
    %1686 = vdwg.mxu0
    %vm1687 = vcmask 31744
    %1688 = vst.msk [vmem:[%s9] sm:$0xff] %vm1687, %v1664
    %1689 = vst.msk [vmem:[%s9 + $0x8] sm:$0xff] %vm1687, %v1667
    %1690 = vst.msk [vmem:[%s9 + $0x10] sm:$0xff] %vm1687, %v1670
    %1691 = vst.msk [vmem:[%s9 + $0x18] sm:$0xff] %vm1687, %v1673
    %1692 = vst.msk [vmem:[%s9 + $0x20] sm:$0xff] %vm1687, %v1676
    %1693 = vst.msk [vmem:[%s9 + $0x28] sm:$0xff] %vm1687, %v1679
    %1694 = vst.msk [vmem:[%s9 + $0x30] sm:$0xff] %vm1687, %v1682
    %1695 = vst.msk [vmem:[%s9 + $0x38] sm:$0xff] %vm1687, %v1685
    // Predicated region
    $region46: #{tpu_custom_call.1} parent=1 // pred_check
      _
    $region47: #{tpu_custom_call.1} parent=1 // pred_check_branch
      %1697 = sbr.rel (0) target = $region49
    $region48: #{tpu_custom_call.1} parent=1 // pred_region
      _
    $region49: #{tpu_custom_call.1} parent=1 // pred_fallthru
      _
    // Predicated region
    $region50: #{tpu_custom_call.1} parent=1 // pred_check
      _
    $region51: #{tpu_custom_call.1} parent=1 // pred_check_branch
      %1699 = sbr.rel (0) target = $region53
    $region52: #{tpu_custom_call.1} parent=1 // pred_region
      %1701 = vsyncadd [#allocation6], 0
      %s1703 = sshll.u32 [#allocation9], 4
      %s1704 = int_to_ptr.vmem [resolvable:$true] %s1703
      %s1705 = sshll.u32 %s10, 4
      %s1706 = int_to_ptr.hbm [resolvable:$true] %s1705
      %1708 = dma.vmem_to_hbm [thread:$0]  %s1704, 128, %s1706, [#allocation6]
    $region53: #{tpu_custom_call.1} parent=1 // pred_fallthru
      _
    // Predicated region
    $region54: #{tpu_custom_call.1} parent=1 // pred_check
      _
    $region55: #{tpu_custom_call.1} parent=1 // pred_check_branch
      %1710 = sbr.rel (0) target = $region57
    $region56: #{tpu_custom_call.1} parent=1 // pred_region
      _
    $region57: #{tpu_custom_call.1} parent=1 // pred_fallthru
      _
    // Predicated region
    $region58: #{tpu_custom_call.1} parent=1 // pred_check
      _
    $region59: #{tpu_custom_call.1} parent=1 // pred_check_branch
      %1712 = sbr.rel (0) target = $region61
    $region60: #{tpu_custom_call.1} parent=1 // pred_region
      %1714 = dma.done [#allocation6], 128
    $region61: #{tpu_custom_call.1} parent=1 // pred_fallthru
      _
    %1715 = vsyncpa [#allocation5], 1
    %1716 = vsyncpa [#allocation8], 1
    %1717 = vsyncpa [#allocation6], 1

</llo_original>
